<compile_context>
chip_gen: v7x
topology: tpu7x:2x2x1
jax: 0.10.0
libtpu: 0.0.40
codegen_flags: <defaults>
</compile_context>

<pallas_src>
import functools

import jax
import jax.numpy as jnp
from jax.experimental import pallas as pl

# ----------------------------------------------------------------------------
# Token vocabularies (AutoGAN-like deterministic choices).
# ----------------------------------------------------------------------------
SHORT_CUT = [0, 1]            # len 2
UP_TYPE = [0, 1, 2]           # len 3
ATTENTION_TYPE = [0, 1]       # len 2
SKIP_TYPE = [0, 1]            # len 2

HID_SIZE = 32
NUM_BLOCKS = 3
T_PAD = 128                   # lane-dense packed decoder width (sum(tokens)=27)


def build_tokens():
    tokens = [len(SHORT_CUT), len(UP_TYPE), len(ATTENTION_TYPE)]
    for i in range(1, NUM_BLOCKS):
        tokens += [len(SHORT_CUT), len(UP_TYPE), len(ATTENTION_TYPE),
                   len(SKIP_TYPE) ** i]
    return tokens


# ----------------------------------------------------------------------------
# Fused Pallas kernel: all controller steps in one grid point.
# ----------------------------------------------------------------------------
def _controller_fused_kernel(emb_seq_ref,                  # VMEM [S, B, H]
                             hx0_ref, cx0_ref,             # VMEM [B, H]
                             w_fused_ref, bias_ref,        # VMEM [2H,4H], [1,4H]
                             dec_w_ref, dec_b_ref,         # VMEM [H,Tp], [1,Tp]
                             logit_ref,                    # VMEM [S, B, Tp]
                             hx_out_ref, cx_out_ref,       # VMEM [B, H]
                             *, hid, num_steps):
    # Weights are VMEM-resident for the whole kernel; read once.
    w_fused = w_fused_ref[...]            # [2H, 4H] (g band pre-scaled by 2)
    bias = bias_ref[...]                  # [1, 4H]  (g band pre-scaled by 2)
    dec_w = dec_w_ref[...]                # [H, T_PAD] all decoders, lane-packed
    dec_b = dec_b_ref[...]                # [1, T_PAD]

    hx = hx0_ref[...]
    cx = cx0_ref[...]
    batch = hx.shape[0]

    # Loop-invariant lane mask for the g (tanh) gate band — hoisted so the
    # broadcast is materialized once, not once per unrolled step.
    lane = jax.lax.broadcasted_iota(jnp.int32, (batch, 4 * hid), 1)
    is_g = (lane >= 2 * hid) & (lane < 3 * hid)

    # Statically unrolled 11-step recurrence; hx/cx stay in vregs throughout.
    for step in range(num_steps):
        embed = emb_seq_ref[step]                        # [B, H]
        xin = jnp.concatenate([embed, hx], axis=1)       # [B, 2H]

        # gates = [embed | hx] @ [W_ih^T ; W_hh^T] + (b_ih + b_hh)   -> [B, 4H]
        gates = jnp.dot(xin, w_fused,
                        preferred_element_type=jnp.float32) + bias

        # Single EUP pass: the g band of w_fused/bias is pre-scaled by 2, so
        # tanh(x) = 2*sigmoid(2x) - 1 is recovered with a cheap VPU affine.
        act = jax.nn.sigmoid(gates)
        act = jnp.where(is_g, 2.0 * act - 1.0, act)

        i_g = act[:, 0 * hid:1 * hid]
        f_g = act[:, 1 * hid:2 * hid]
        g_g = act[:, 2 * hid:3 * hid]
        o_g = act[:, 3 * hid:4 * hid]

        cx = f_g * cx + i_g * g_g
        hx = o_g * jnp.tanh(cx)

        # All decoders at once (lane-packed); one lane-dense [B, 128] store.
        logit_ref[step] = (jnp.dot(hx, dec_w,
                                   preferred_element_type=jnp.float32)
                           + dec_b)

    hx_out_ref[...] = hx
    cx_out_ref[...] = cx


def _build_fused_call(num_steps, batch, hid):
    # No grid: every operand is a full-extent VMEM-resident block, DMA'd once;
    # the logits block is written back once.  Total working set < 100 KB, so
    # VMEM capacity is a non-factor on v5e/v6e/v7x — no tiling needed.
    # TODO(synk): for many independent sample chains (e.g. v7x's 2 TensorCores)
    # add a leading "parallel" sample grid axis and batch the chains.
    out_shape = [
        jax.ShapeDtypeStruct((num_steps, batch, T_PAD), jnp.float32),
        jax.ShapeDtypeStruct((batch, hid), jnp.float32),
        jax.ShapeDtypeStruct((batch, hid), jnp.float32),
    ]

    flops = num_steps * (2 * batch * (2 * hid) * (4 * hid)   # fused LSTM matmul
                         + 2 * batch * hid * T_PAD)           # packed decoders
    transcendentals = num_steps * batch * (4 * hid + hid)     # sigmoid + tanh(cx)
    bytes_accessed = 4 * (num_steps * batch * hid             # embedding sequence
                          + 2 * batch * hid                   # hx0, cx0
                          + 2 * hid * 4 * hid + 4 * hid       # fused weights/bias
                          + (hid + 1) * T_PAD                 # packed decoders
                          + num_steps * batch * T_PAD         # logits out
                          + 2 * batch * hid)                  # hx/cx out

    return pl.pallas_call(
        functools.partial(_controller_fused_kernel,
                          hid=hid, num_steps=num_steps),
        out_shape=out_shape,
        cost_estimate=pl.CostEstimate(flops=flops,
                                      transcendentals=transcendentals,
                                      bytes_accessed=bytes_accessed),
    )


# ----------------------------------------------------------------------------
# Parameter construction (deterministic, synthetic; PyTorch layouts kept for
# the pure-JAX reference check).
# ----------------------------------------------------------------------------
def init_controller_params(key, hid_size, tokens):
    n_vocab = sum(tokens)
    num_steps = len(tokens)
    ks = jax.random.split(key, 5 + 2 * num_steps)
    scale = 1.0 / jnp.sqrt(jnp.float32(hid_size))

    emb = jax.random.normal(ks[0], (n_vocab, hid_size), jnp.float32) * scale
    w_ih = jax.random.normal(ks[1], (4 * hid_size, hid_size), jnp.float32) * scale
    w_hh = jax.random.normal(ks[2], (4 * hid_size, hid_size), jnp.float32) * scale
    b_ih = jax.random.normal(ks[3], (4 * hid_size,), jnp.float32) * scale
    b_hh = jax.random.normal(ks[4], (4 * hid_size,), jnp.float32) * scale

    dec_w, dec_b = [], []                  # PyTorch layouts [tok, H], [tok]
    for i, tok in enumerate(tokens):
        dec_w.append(jax.random.normal(ks[5 + 2 * i], (tok, hid_size),
                                       jnp.float32) * scale)
        dec_b.append(jax.random.normal(ks[6 + 2 * i], (tok,),
                                       jnp.float32) * scale)

    # Fused LSTM weight [W_ih^T ; W_hh^T] with the g (tanh) band columns and
    # bias entries pre-scaled by 2 (single-sigmoid EUP trick in the kernel).
    w_fused = jnp.concatenate([w_ih.T, w_hh.T], axis=0)          # [2H, 4H]
    bias = b_ih + b_hh                                            # [4H]
    g0, g1 = 2 * hid_size, 3 * hid_size
    w_fused = w_fused.at[:, g0:g1].multiply(2.0)
    bias = bias.at[g0:g1].multiply(2.0)

    # Pack all decoders along the lane axis (sum(tokens) = 27 <= 128).
    offsets = [0]
    for tok in tokens[:-1]:
        offsets.append(offsets[-1] + tok)
    dec_w_all = jnp.zeros((hid_size, T_PAD), jnp.float32)
    dec_b_all = jnp.zeros((1, T_PAD), jnp.float32)
    for i, tok in enumerate(tokens):
        off = offsets[i]
        dec_w_all = dec_w_all.at[:, off:off + tok].set(dec_w[i].T)
        dec_b_all = dec_b_all.at[0, off:off + tok].set(dec_b[i])

    return {
        "tokens": tuple(tokens),
        "offsets": tuple(offsets),
        "n_vocab": n_vocab,
        "embedding": emb,                                     # [V, H]
        "w_fused": w_fused,                                   # [2H, 4H]
        "lstm_bias": bias.reshape(1, 4 * hid_size),           # [1, 4H]
        "dec_w_all": dec_w_all,                               # [H, T_PAD]
        "dec_b_all": dec_b_all,                               # [1, T_PAD]
        "_ref": {"w_ih": w_ih, "w_hh": w_hh, "b_ih": b_ih, "b_hh": b_hh,
                 "dec_w": dec_w, "dec_b": dec_b},
    }


# ----------------------------------------------------------------------------
# Wrappers.
# ----------------------------------------------------------------------------
def controller_unrolled_forward(params, x0, ids, hidden):
    """Runs Controller.forward() for every decode step, fused into one kernel.

    Step 0 consumes the float input `x0` directly (index == 0 branch);
    step t > 0 embeds `ids[t]` (index > 0 branch).  Returns the per-step logits
    (exact widths) and the final (hx, cx).
    """
    hx0, cx0 = hidden
    batch, hid = x0.shape
    tokens = params["tokens"]
    offsets = params["offsets"]
    num_steps = len(tokens)

    # Embedding gather in the wrapper (trivial XLA gather on S*B*H floats);
    # step 0 uses x0 directly.
    emb_seq = jnp.concatenate(
        [x0[None].astype(jnp.float32),
         params["embedding"][ids[1:].astype(jnp.int32)]], axis=0)   # [S, B, H]

    call = _build_fused_call(num_steps, batch, hid)
    logits_pad, hx_f, cx_f = call(
        emb_seq, hx0, cx0,
        params["w_fused"], params["lstm_bias"],
        params["dec_w_all"], params["dec_b_all"])

    logits = [logits_pad[i, :, offsets[i]:offsets[i] + tok]
              for i, tok in enumerate(tokens)]
    return logits, (hx_f, cx_f)


def _reference_forward(params, x0, ids, hidden):
    """Pure-JAX reference mirroring the PyTorch module step-by-step."""
    r = params["_ref"]
    tokens = params["tokens"]
    hid = x0.shape[1]
    hx, cx = hidden
    logits = []
    for step, _tok in enumerate(tokens):
        embed = x0 if step == 0 else params["embedding"][ids[step]]
        gates = embed @ r["w_ih"].T + hx @ r["w_hh"].T + r["b_ih"] + r["b_hh"]
        i_g = jax.nn.sigmoid(gates[:, 0 * hid:1 * hid])
        f_g = jax.nn.sigmoid(gates[:, 1 * hid:2 * hid])
        g_g = jnp.tanh(gates[:, 2 * hid:3 * hid])
        o_g = jax.nn.sigmoid(gates[:, 3 * hid:4 * hid])
        cx = f_g * cx + i_g * g_g
        hx = o_g * jnp.tanh(cx)
        logits.append(hx @ r["dec_w"][step].T + r["dec_b"][step])
    return logits, (hx, cx)


# TODO(synk): Controller.sample()'s multinomial action sampling and Python-side
# architecture bookkeeping are not kernelized; the fused kernel consumes the
# token-id sequence (as sample() would feed forward()) and covers the hot path.

if __name__ == "__main__":
    tokens = build_tokens()              # [2,3,2, 2,3,2,2, 2,3,2,4] -> 11 steps
    num_steps = len(tokens)
    n_vocab = sum(tokens)                # 27
    batch = 8                            # fills the f32 sublanes
    key = jax.random.PRNGKey(0)
    pkey, xkey, ikey = jax.random.split(key, 3)

    params = init_controller_params(pkey, HID_SIZE, tokens)

    # initHidden: zeros [B, H]
    hidden = (jnp.zeros((batch, HID_SIZE), jnp.float32),
              jnp.zeros((batch, HID_SIZE), jnp.float32))
    # Step-0 float input (Controller.sample uses zeros; any float works).
    x0 = jax.random.normal(xkey, (batch, HID_SIZE), jnp.float32) * 0.1
    # Token ids fed at steps 1..S-1 (ids[0] is unused); in sample() these come
    # from the previous step's multinomial draw plus the token offset.
    ids = jax.random.randint(ikey, (num_steps, batch), 0, n_vocab,
                             dtype=jnp.int32)

    logits, (hx, cx) = controller_unrolled_forward(params, x0, ids, hidden)
    jax.block_until_ready((logits, hx, cx))

    # Correctness check against the pure-JAX step-by-step reference.  5e-3 is
    # 10x tighter than before; the residual slack covers default-precision MXU
    # f32 matmuls (bf16 passes) on both sides and the tanh=2*sigmoid(2x)-1
    # rewrite's slightly different rounding.
    ref_logits, (ref_hx, ref_cx) = _reference_forward(params, x0, ids, hidden)
    for i, tok in enumerate(tokens):
        assert logits[i].shape == (batch, tok), (i, logits[i].shape)
        assert jnp.allclose(logits[i], ref_logits[i], atol=5e-3), i
    assert hx.shape == (batch, HID_SIZE) and cx.shape == (batch, HID_SIZE)
    assert jnp.allclose(hx, ref_hx, atol=5e-3)
    assert jnp.allclose(cx, ref_cx, atol=5e-3)
    print("KERNEL_OK")
</pallas_src>

<mosaic_0001>
module attributes {stable_mosaic.version = 11 : i64} {
  func.func @_controller_fused_kernel(%arg0: memref<11x8x32xf32, #tpu.memory_space<vmem>>, %arg1: memref<8x32xf32, #tpu.memory_space<vmem>>, %arg2: memref<8x32xf32, #tpu.memory_space<vmem>>, %arg3: memref<64x128xf32, #tpu.memory_space<vmem>>, %arg4: memref<1x128xf32, #tpu.memory_space<vmem>>, %arg5: memref<32x128xf32, #tpu.memory_space<vmem>>, %arg6: memref<1x128xf32, #tpu.memory_space<vmem>>, %arg7: memref<11x8x128xf32, #tpu.memory_space<vmem>>, %arg8: memref<8x32xf32, #tpu.memory_space<vmem>>, %arg9: memref<8x32xf32, #tpu.memory_space<vmem>>) attributes {dimension_semantics = [], scalar_prefetch = 0 : i64, scratch_operands = 0 : i64, tpu.core_type = #tpu.core_type<tc>} {
    %c0 = arith.constant 0 : index
    %c0_0 = arith.constant 0 : index
    %0 = vector.load %arg3[%c0, %c0_0] : memref<64x128xf32, #tpu.memory_space<vmem>>, vector<64x128xf32>
    %c0_1 = arith.constant 0 : index
    %c0_2 = arith.constant 0 : index
    %1 = vector.load %arg4[%c0_1, %c0_2] : memref<1x128xf32, #tpu.memory_space<vmem>>, vector<1x128xf32>
    %c0_3 = arith.constant 0 : index
    %c0_4 = arith.constant 0 : index
    %2 = vector.load %arg5[%c0_3, %c0_4] : memref<32x128xf32, #tpu.memory_space<vmem>>, vector<32x128xf32>
    %c0_5 = arith.constant 0 : index
    %c0_6 = arith.constant 0 : index
    %3 = vector.load %arg6[%c0_5, %c0_6] : memref<1x128xf32, #tpu.memory_space<vmem>>, vector<1x128xf32>
    %c0_7 = arith.constant 0 : index
    %c0_8 = arith.constant 0 : index
    %4 = vector.load %arg1[%c0_7, %c0_8] : memref<8x32xf32, #tpu.memory_space<vmem>>, vector<8x32xf32>
    %c0_9 = arith.constant 0 : index
    %c0_10 = arith.constant 0 : index
    %5 = vector.load %arg2[%c0_9, %c0_10] : memref<8x32xf32, #tpu.memory_space<vmem>>, vector<8x32xf32>
    %6 = tpu.iota {dimensions = array<i32: 1>} : vector<8x128xi32>
    %c64_i32 = arith.constant 64 : i32
    %7 = vector.broadcast %c64_i32 : i32 to vector<8x128xi32>
    %8 = arith.cmpi sge, %6, %7 : vector<8x128xi32>
    %c96_i32 = arith.constant 96 : i32
    %9 = vector.broadcast %c96_i32 : i32 to vector<8x128xi32>
    %10 = arith.cmpi slt, %6, %9 : vector<8x128xi32>
    %11 = arith.andi %8, %10 : vector<8x128xi1>
    %c0_11 = arith.constant 0 : index
    %c0_12 = arith.constant 0 : index
    %c0_13 = arith.constant 0 : index
    %12 = vector.load %arg0[%c0_11, %c0_12, %c0_13] : memref<11x8x32xf32, #tpu.memory_space<vmem>>, vector<1x8x32xf32>
    %13 = vector.shape_cast %12 : vector<1x8x32xf32> to vector<8x32xf32>
    %14 = tpu.concatenate %13, %4 in 1 : vector<8x32xf32>, vector<8x32xf32> -> vector<8x64xf32>
    %cst = arith.constant dense<0.000000e+00> : vector<8x128xf32>
    %15 = tpu.matmul %14, %0, %cst {dimension_numbers = #tpu.dot_dimension_numbers<[1], [0], [0], [1], [0, 0, 1, 1], [], []>} : vector<8x64xf32>, vector<64x128xf32>, vector<8x128xf32> -> vector<8x128xf32>
    %16 = vector.broadcast %1 : vector<1x128xf32> to vector<8x128xf32>
    %17 = arith.addf %15, %16 : vector<8x128xf32>
    %18 = arith.negf %17 : vector<8x128xf32>
    %19 = math.exp %18 : vector<8x128xf32>
    %cst_14 = arith.constant 1.000000e+00 : f32
    %20 = vector.broadcast %cst_14 : f32 to vector<8x128xf32>
    %21 = arith.addf %20, %19 : vector<8x128xf32>
    %22 = arith.divf %20, %21 : vector<8x128xf32>
    %cst_15 = arith.constant 2.000000e+00 : f32
    %23 = vector.broadcast %cst_15 : f32 to vector<8x128xf32>
    %24 = arith.mulf %23, %22 : vector<8x128xf32>
    %cst_16 = arith.constant 1.000000e+00 : f32
    %25 = vector.broadcast %cst_16 : f32 to vector<8x128xf32>
    %26 = arith.subf %24, %25 : vector<8x128xf32>
    %27 = arith.select %11, %26, %22 : vector<8x128xi1>, vector<8x128xf32>
    %28 = vector.extract_strided_slice %27 {offsets = [0, 0], sizes = [8, 32], strides = [1, 1]} : vector<8x128xf32> to vector<8x32xf32>
    %29 = vector.extract_strided_slice %27 {offsets = [0, 32], sizes = [8, 32], strides = [1, 1]} : vector<8x128xf32> to vector<8x32xf32>
    %30 = vector.extract_strided_slice %27 {offsets = [0, 64], sizes = [8, 32], strides = [1, 1]} : vector<8x128xf32> to vector<8x32xf32>
    %31 = vector.extract_strided_slice %27 {offsets = [0, 96], sizes = [8, 32], strides = [1, 1]} : vector<8x128xf32> to vector<8x32xf32>
    %32 = arith.mulf %29, %5 : vector<8x32xf32>
    %33 = arith.mulf %28, %30 : vector<8x32xf32>
    %34 = arith.addf %32, %33 : vector<8x32xf32>
    %35 = math.tanh %34 : vector<8x32xf32>
    %36 = arith.mulf %31, %35 : vector<8x32xf32>
    %cst_17 = arith.constant dense<0.000000e+00> : vector<8x128xf32>
    %37 = tpu.matmul %36, %2, %cst_17 {dimension_numbers = #tpu.dot_dimension_numbers<[1], [0], [0], [1], [0, 0, 1, 1], [], []>} : vector<8x32xf32>, vector<32x128xf32>, vector<8x128xf32> -> vector<8x128xf32>
    %38 = vector.broadcast %3 : vector<1x128xf32> to vector<8x128xf32>
    %39 = arith.addf %37, %38 : vector<8x128xf32>
    %c0_18 = arith.constant 0 : index
    %c0_19 = arith.constant 0 : index
    %c0_20 = arith.constant 0 : index
    %40 = vector.load %arg7[%c0_18, %c0_19, %c0_20] : memref<11x8x128xf32, #tpu.memory_space<vmem>>, vector<1x8x128xf32>
    %41 = vector.shape_cast %40 : vector<1x8x128xf32> to vector<8x128xf32>
    %42 = vector.shape_cast %39 : vector<8x128xf32> to vector<1x8x128xf32>
    tpu.vector_store %arg7[%c0_18, %c0_19, %c0_20], %42 {strides = array<i32>} : memref<11x8x128xf32, #tpu.memory_space<vmem>>, vector<1x8x128xf32>,
    %c1 = arith.constant 1 : index
    %c0_21 = arith.constant 0 : index
    %c0_22 = arith.constant 0 : index
    %43 = vector.load %arg0[%c1, %c0_21, %c0_22] : memref<11x8x32xf32, #tpu.memory_space<vmem>>, vector<1x8x32xf32>
    %44 = vector.shape_cast %43 : vector<1x8x32xf32> to vector<8x32xf32>
    %45 = tpu.concatenate %44, %36 in 1 : vector<8x32xf32>, vector<8x32xf32> -> vector<8x64xf32>
    %cst_23 = arith.constant dense<0.000000e+00> : vector<8x128xf32>
    %46 = tpu.matmul %45, %0, %cst_23 {dimension_numbers = #tpu.dot_dimension_numbers<[1], [0], [0], [1], [0, 0, 1, 1], [], []>} : vector<8x64xf32>, vector<64x128xf32>, vector<8x128xf32> -> vector<8x128xf32>
    %47 = vector.broadcast %1 : vector<1x128xf32> to vector<8x128xf32>
    %48 = arith.addf %46, %47 : vector<8x128xf32>
    %49 = arith.negf %48 : vector<8x128xf32>
    %50 = math.exp %49 : vector<8x128xf32>
    %cst_24 = arith.constant 1.000000e+00 : f32
    %51 = vector.broadcast %cst_24 : f32 to vector<8x128xf32>
    %52 = arith.addf %51, %50 : vector<8x128xf32>
    %53 = arith.divf %51, %52 : vector<8x128xf32>
    %cst_25 = arith.constant 2.000000e+00 : f32
    %54 = vector.broadcast %cst_25 : f32 to vector<8x128xf32>
    %55 = arith.mulf %54, %53 : vector<8x128xf32>
    %cst_26 = arith.constant 1.000000e+00 : f32
    %56 = vector.broadcast %cst_26 : f32 to vector<8x128xf32>
    %57 = arith.subf %55, %56 : vector<8x128xf32>
    %58 = arith.select %11, %57, %53 : vector<8x128xi1>, vector<8x128xf32>
    %59 = vector.extract_strided_slice %58 {offsets = [0, 0], sizes = [8, 32], strides = [1, 1]} : vector<8x128xf32> to vector<8x32xf32>
    %60 = vector.extract_strided_slice %58 {offsets = [0, 32], sizes = [8, 32], strides = [1, 1]} : vector<8x128xf32> to vector<8x32xf32>
    %61 = vector.extract_strided_slice %58 {offsets = [0, 64], sizes = [8, 32], strides = [1, 1]} : vector<8x128xf32> to vector<8x32xf32>
    %62 = vector.extract_strided_slice %58 {offsets = [0, 96], sizes = [8, 32], strides = [1, 1]} : vector<8x128xf32> to vector<8x32xf32>
    %63 = arith.mulf %60, %34 : vector<8x32xf32>
    %64 = arith.mulf %59, %61 : vector<8x32xf32>
    %65 = arith.addf %63, %64 : vector<8x32xf32>
    %66 = math.tanh %65 : vector<8x32xf32>
    %67 = arith.mulf %62, %66 : vector<8x32xf32>
    %cst_27 = arith.constant dense<0.000000e+00> : vector<8x128xf32>
    %68 = tpu.matmul %67, %2, %cst_27 {dimension_numbers = #tpu.dot_dimension_numbers<[1], [0], [0], [1], [0, 0, 1, 1], [], []>} : vector<8x32xf32>, vector<32x128xf32>, vector<8x128xf32> -> vector<8x128xf32>
    %69 = vector.broadcast %3 : vector<1x128xf32> to vector<8x128xf32>
    %70 = arith.addf %68, %69 : vector<8x128xf32>
    %c1_28 = arith.constant 1 : index
    %c0_29 = arith.constant 0 : index
    %c0_30 = arith.constant 0 : index
    %71 = vector.load %arg7[%c1_28, %c0_29, %c0_30] : memref<11x8x128xf32, #tpu.memory_space<vmem>>, vector<1x8x128xf32>
    %72 = vector.shape_cast %71 : vector<1x8x128xf32> to vector<8x128xf32>
    %73 = vector.shape_cast %70 : vector<8x128xf32> to vector<1x8x128xf32>
    tpu.vector_store %arg7[%c1_28, %c0_29, %c0_30], %73 {strides = array<i32>} : memref<11x8x128xf32, #tpu.memory_space<vmem>>, vector<1x8x128xf32>,
    %c2 = arith.constant 2 : index
    %c0_31 = arith.constant 0 : index
    %c0_32 = arith.constant 0 : index
    %74 = vector.load %arg0[%c2, %c0_31, %c0_32] : memref<11x8x32xf32, #tpu.memory_space<vmem>>, vector<1x8x32xf32>
    %75 = vector.shape_cast %74 : vector<1x8x32xf32> to vector<8x32xf32>
    %76 = tpu.concatenate %75, %67 in 1 : vector<8x32xf32>, vector<8x32xf32> -> vector<8x64xf32>
    %cst_33 = arith.constant dense<0.000000e+00> : vector<8x128xf32>
    %77 = tpu.matmul %76, %0, %cst_33 {dimension_numbers = #tpu.dot_dimension_numbers<[1], [0], [0], [1], [0, 0, 1, 1], [], []>} : vector<8x64xf32>, vector<64x128xf32>, vector<8x128xf32> -> vector<8x128xf32>
    %78 = vector.broadcast %1 : vector<1x128xf32> to vector<8x128xf32>
    %79 = arith.addf %77, %78 : vector<8x128xf32>
    %80 = arith.negf %79 : vector<8x128xf32>
    %81 = math.exp %80 : vector<8x128xf32>
    %cst_34 = arith.constant 1.000000e+00 : f32
    %82 = vector.broadcast %cst_34 : f32 to vector<8x128xf32>
    %83 = arith.addf %82, %81 : vector<8x128xf32>
    %84 = arith.divf %82, %83 : vector<8x128xf32>
    %cst_35 = arith.constant 2.000000e+00 : f32
    %85 = vector.broadcast %cst_35 : f32 to vector<8x128xf32>
    %86 = arith.mulf %85, %84 : vector<8x128xf32>
    %cst_36 = arith.constant 1.000000e+00 : f32
    %87 = vector.broadcast %cst_36 : f32 to vector<8x128xf32>
    %88 = arith.subf %86, %87 : vector<8x128xf32>
    %89 = arith.select %11, %88, %84 : vector<8x128xi1>, vector<8x128xf32>
    %90 = vector.extract_strided_slice %89 {offsets = [0, 0], sizes = [8, 32], strides = [1, 1]} : vector<8x128xf32> to vector<8x32xf32>
    %91 = vector.extract_strided_slice %89 {offsets = [0, 32], sizes = [8, 32], strides = [1, 1]} : vector<8x128xf32> to vector<8x32xf32>
    %92 = vector.extract_strided_slice %89 {offsets = [0, 64], sizes = [8, 32], strides = [1, 1]} : vector<8x128xf32> to vector<8x32xf32>
    %93 = vector.extract_strided_slice %89 {offsets = [0, 96], sizes = [8, 32], strides = [1, 1]} : vector<8x128xf32> to vector<8x32xf32>
    %94 = arith.mulf %91, %65 : vector<8x32xf32>
    %95 = arith.mulf %90, %92 : vector<8x32xf32>
    %96 = arith.addf %94, %95 : vector<8x32xf32>
    %97 = math.tanh %96 : vector<8x32xf32>
    %98 = arith.mulf %93, %97 : vector<8x32xf32>
    %cst_37 = arith.constant dense<0.000000e+00> : vector<8x128xf32>
    %99 = tpu.matmul %98, %2, %cst_37 {dimension_numbers = #tpu.dot_dimension_numbers<[1], [0], [0], [1], [0, 0, 1, 1], [], []>} : vector<8x32xf32>, vector<32x128xf32>, vector<8x128xf32> -> vector<8x128xf32>
    %100 = vector.broadcast %3 : vector<1x128xf32> to vector<8x128xf32>
    %101 = arith.addf %99, %100 : vector<8x128xf32>
    %c2_38 = arith.constant 2 : index
    %c0_39 = arith.constant 0 : index
    %c0_40 = arith.constant 0 : index
    %102 = vector.load %arg7[%c2_38, %c0_39, %c0_40] : memref<11x8x128xf32, #tpu.memory_space<vmem>>, vector<1x8x128xf32>
    %103 = vector.shape_cast %102 : vector<1x8x128xf32> to vector<8x128xf32>
    %104 = vector.shape_cast %101 : vector<8x128xf32> to vector<1x8x128xf32>
    tpu.vector_store %arg7[%c2_38, %c0_39, %c0_40], %104 {strides = array<i32>} : memref<11x8x128xf32, #tpu.memory_space<vmem>>, vector<1x8x128xf32>,
    %c3 = arith.constant 3 : index
    %c0_41 = arith.constant 0 : index
    %c0_42 = arith.constant 0 : index
    %105 = vector.load %arg0[%c3, %c0_41, %c0_42] : memref<11x8x32xf32, #tpu.memory_space<vmem>>, vector<1x8x32xf32>
    %106 = vector.shape_cast %105 : vector<1x8x32xf32> to vector<8x32xf32>
    %107 = tpu.concatenate %106, %98 in 1 : vector<8x32xf32>, vector<8x32xf32> -> vector<8x64xf32>
    %cst_43 = arith.constant dense<0.000000e+00> : vector<8x128xf32>
    %108 = tpu.matmul %107, %0, %cst_43 {dimension_numbers = #tpu.dot_dimension_numbers<[1], [0], [0], [1], [0, 0, 1, 1], [], []>} : vector<8x64xf32>, vector<64x128xf32>, vector<8x128xf32> -> vector<8x128xf32>
    %109 = vector.broadcast %1 : vector<1x128xf32> to vector<8x128xf32>
    %110 = arith.addf %108, %109 : vector<8x128xf32>
    %111 = arith.negf %110 : vector<8x128xf32>
    %112 = math.exp %111 : vector<8x128xf32>
    %cst_44 = arith.constant 1.000000e+00 : f32
    %113 = vector.broadcast %cst_44 : f32 to vector<8x128xf32>
    %114 = arith.addf %113, %112 : vector<8x128xf32>
    %115 = arith.divf %113, %114 : vector<8x128xf32>
    %cst_45 = arith.constant 2.000000e+00 : f32
    %116 = vector.broadcast %cst_45 : f32 to vector<8x128xf32>
    %117 = arith.mulf %116, %115 : vector<8x128xf32>
    %cst_46 = arith.constant 1.000000e+00 : f32
    %118 = vector.broadcast %cst_46 : f32 to vector<8x128xf32>
    %119 = arith.subf %117, %118 : vector<8x128xf32>
    %120 = arith.select %11, %119, %115 : vector<8x128xi1>, vector<8x128xf32>
    %121 = vector.extract_strided_slice %120 {offsets = [0, 0], sizes = [8, 32], strides = [1, 1]} : vector<8x128xf32> to vector<8x32xf32>
    %122 = vector.extract_strided_slice %120 {offsets = [0, 32], sizes = [8, 32], strides = [1, 1]} : vector<8x128xf32> to vector<8x32xf32>
    %123 = vector.extract_strided_slice %120 {offsets = [0, 64], sizes = [8, 32], strides = [1, 1]} : vector<8x128xf32> to vector<8x32xf32>
    %124 = vector.extract_strided_slice %120 {offsets = [0, 96], sizes = [8, 32], strides = [1, 1]} : vector<8x128xf32> to vector<8x32xf32>
    %125 = arith.mulf %122, %96 : vector<8x32xf32>
    %126 = arith.mulf %121, %123 : vector<8x32xf32>
    %127 = arith.addf %125, %126 : vector<8x32xf32>
    %128 = math.tanh %127 : vector<8x32xf32>
    %129 = arith.mulf %124, %128 : vector<8x32xf32>
    %cst_47 = arith.constant dense<0.000000e+00> : vector<8x128xf32>
    %130 = tpu.matmul %129, %2, %cst_47 {dimension_numbers = #tpu.dot_dimension_numbers<[1], [0], [0], [1], [0, 0, 1, 1], [], []>} : vector<8x32xf32>, vector<32x128xf32>, vector<8x128xf32> -> vector<8x128xf32>
    %131 = vector.broadcast %3 : vector<1x128xf32> to vector<8x128xf32>
    %132 = arith.addf %130, %131 : vector<8x128xf32>
    %c3_48 = arith.constant 3 : index
    %c0_49 = arith.constant 0 : index
    %c0_50 = arith.constant 0 : index
    %133 = vector.load %arg7[%c3_48, %c0_49, %c0_50] : memref<11x8x128xf32, #tpu.memory_space<vmem>>, vector<1x8x128xf32>
    %134 = vector.shape_cast %133 : vector<1x8x128xf32> to vector<8x128xf32>
    %135 = vector.shape_cast %132 : vector<8x128xf32> to vector<1x8x128xf32>
    tpu.vector_store %arg7[%c3_48, %c0_49, %c0_50], %135 {strides = array<i32>} : memref<11x8x128xf32, #tpu.memory_space<vmem>>, vector<1x8x128xf32>,
    %c4 = arith.constant 4 : index
    %c0_51 = arith.constant 0 : index
    %c0_52 = arith.constant 0 : index
    %136 = vector.load %arg0[%c4, %c0_51, %c0_52] : memref<11x8x32xf32, #tpu.memory_space<vmem>>, vector<1x8x32xf32>
    %137 = vector.shape_cast %136 : vector<1x8x32xf32> to vector<8x32xf32>
    %138 = tpu.concatenate %137, %129 in 1 : vector<8x32xf32>, vector<8x32xf32> -> vector<8x64xf32>
    %cst_53 = arith.constant dense<0.000000e+00> : vector<8x128xf32>
    %139 = tpu.matmul %138, %0, %cst_53 {dimension_numbers = #tpu.dot_dimension_numbers<[1], [0], [0], [1], [0, 0, 1, 1], [], []>} : vector<8x64xf32>, vector<64x128xf32>, vector<8x128xf32> -> vector<8x128xf32>
    %140 = vector.broadcast %1 : vector<1x128xf32> to vector<8x128xf32>
    %141 = arith.addf %139, %140 : vector<8x128xf32>
    %142 = arith.negf %141 : vector<8x128xf32>
    %143 = math.exp %142 : vector<8x128xf32>
    %cst_54 = arith.constant 1.000000e+00 : f32
    %144 = vector.broadcast %cst_54 : f32 to vector<8x128xf32>
    %145 = arith.addf %144, %143 : vector<8x128xf32>
    %146 = arith.divf %144, %145 : vector<8x128xf32>
    %cst_55 = arith.constant 2.000000e+00 : f32
    %147 = vector.broadcast %cst_55 : f32 to vector<8x128xf32>
    %148 = arith.mulf %147, %146 : vector<8x128xf32>
    %cst_56 = arith.constant 1.000000e+00 : f32
    %149 = vector.broadcast %cst_56 : f32 to vector<8x128xf32>
    %150 = arith.subf %148, %149 : vector<8x128xf32>
    %151 = arith.select %11, %150, %146 : vector<8x128xi1>, vector<8x128xf32>
    %152 = vector.extract_strided_slice %151 {offsets = [0, 0], sizes = [8, 32], strides = [1, 1]} : vector<8x128xf32> to vector<8x32xf32>
    %153 = vector.extract_strided_slice %151 {offsets = [0, 32], sizes = [8, 32], strides = [1, 1]} : vector<8x128xf32> to vector<8x32xf32>
    %154 = vector.extract_strided_slice %151 {offsets = [0, 64], sizes = [8, 32], strides = [1, 1]} : vector<8x128xf32> to vector<8x32xf32>
    %155 = vector.extract_strided_slice %151 {offsets = [0, 96], sizes = [8, 32], strides = [1, 1]} : vector<8x128xf32> to vector<8x32xf32>
    %156 = arith.mulf %153, %127 : vector<8x32xf32>
    %157 = arith.mulf %152, %154 : vector<8x32xf32>
    %158 = arith.addf %156, %157 : vector<8x32xf32>
    %159 = math.tanh %158 : vector<8x32xf32>
    %160 = arith.mulf %155, %159 : vector<8x32xf32>
    %cst_57 = arith.constant dense<0.000000e+00> : vector<8x128xf32>
    %161 = tpu.matmul %160, %2, %cst_57 {dimension_numbers = #tpu.dot_dimension_numbers<[1], [0], [0], [1], [0, 0, 1, 1], [], []>} : vector<8x32xf32>, vector<32x128xf32>, vector<8x128xf32> -> vector<8x128xf32>
    %162 = vector.broadcast %3 : vector<1x128xf32> to vector<8x128xf32>
    %163 = arith.addf %161, %162 : vector<8x128xf32>
    %c4_58 = arith.constant 4 : index
    %c0_59 = arith.constant 0 : index
    %c0_60 = arith.constant 0 : index
    %164 = vector.load %arg7[%c4_58, %c0_59, %c0_60] : memref<11x8x128xf32, #tpu.memory_space<vmem>>, vector<1x8x128xf32>
    %165 = vector.shape_cast %164 : vector<1x8x128xf32> to vector<8x128xf32>
    %166 = vector.shape_cast %163 : vector<8x128xf32> to vector<1x8x128xf32>
    tpu.vector_store %arg7[%c4_58, %c0_59, %c0_60], %166 {strides = array<i32>} : memref<11x8x128xf32, #tpu.memory_space<vmem>>, vector<1x8x128xf32>,
    %c5 = arith.constant 5 : index
    %c0_61 = arith.constant 0 : index
    %c0_62 = arith.constant 0 : index
    %167 = vector.load %arg0[%c5, %c0_61, %c0_62] : memref<11x8x32xf32, #tpu.memory_space<vmem>>, vector<1x8x32xf32>
    %168 = vector.shape_cast %167 : vector<1x8x32xf32> to vector<8x32xf32>
    %169 = tpu.concatenate %168, %160 in 1 : vector<8x32xf32>, vector<8x32xf32> -> vector<8x64xf32>
    %cst_63 = arith.constant dense<0.000000e+00> : vector<8x128xf32>
    %170 = tpu.matmul %169, %0, %cst_63 {dimension_numbers = #tpu.dot_dimension_numbers<[1], [0], [0], [1], [0, 0, 1, 1], [], []>} : vector<8x64xf32>, vector<64x128xf32>, vector<8x128xf32> -> vector<8x128xf32>
    %171 = vector.broadcast %1 : vector<1x128xf32> to vector<8x128xf32>
    %172 = arith.addf %170, %171 : vector<8x128xf32>
    %173 = arith.negf %172 : vector<8x128xf32>
    %174 = math.exp %173 : vector<8x128xf32>
    %cst_64 = arith.constant 1.000000e+00 : f32
    %175 = vector.broadcast %cst_64 : f32 to vector<8x128xf32>
    %176 = arith.addf %175, %174 : vector<8x128xf32>
    %177 = arith.divf %175, %176 : vector<8x128xf32>
    %cst_65 = arith.constant 2.000000e+00 : f32
    %178 = vector.broadcast %cst_65 : f32 to vector<8x128xf32>
    %179 = arith.mulf %178, %177 : vector<8x128xf32>
    %cst_66 = arith.constant 1.000000e+00 : f32
    %180 = vector.broadcast %cst_66 : f32 to vector<8x128xf32>
    %181 = arith.subf %179, %180 : vector<8x128xf32>
    %182 = arith.select %11, %181, %177 : vector<8x128xi1>, vector<8x128xf32>
    %183 = vector.extract_strided_slice %182 {offsets = [0, 0], sizes = [8, 32], strides = [1, 1]} : vector<8x128xf32> to vector<8x32xf32>
    %184 = vector.extract_strided_slice %182 {offsets = [0, 32], sizes = [8, 32], strides = [1, 1]} : vector<8x128xf32> to vector<8x32xf32>
    %185 = vector.extract_strided_slice %182 {offsets = [0, 64], sizes = [8, 32], strides = [1, 1]} : vector<8x128xf32> to vector<8x32xf32>
    %186 = vector.extract_strided_slice %182 {offsets = [0, 96], sizes = [8, 32], strides = [1, 1]} : vector<8x128xf32> to vector<8x32xf32>
    %187 = arith.mulf %184, %158 : vector<8x32xf32>
    %188 = arith.mulf %183, %185 : vector<8x32xf32>
    %189 = arith.addf %187, %188 : vector<8x32xf32>
    %190 = math.tanh %189 : vector<8x32xf32>
    %191 = arith.mulf %186, %190 : vector<8x32xf32>
    %cst_67 = arith.constant dense<0.000000e+00> : vector<8x128xf32>
    %192 = tpu.matmul %191, %2, %cst_67 {dimension_numbers = #tpu.dot_dimension_numbers<[1], [0], [0], [1], [0, 0, 1, 1], [], []>} : vector<8x32xf32>, vector<32x128xf32>, vector<8x128xf32> -> vector<8x128xf32>
    %193 = vector.broadcast %3 : vector<1x128xf32> to vector<8x128xf32>
    %194 = arith.addf %192, %193 : vector<8x128xf32>
    %c5_68 = arith.constant 5 : index
    %c0_69 = arith.constant 0 : index
    %c0_70 = arith.constant 0 : index
    %195 = vector.load %arg7[%c5_68, %c0_69, %c0_70] : memref<11x8x128xf32, #tpu.memory_space<vmem>>, vector<1x8x128xf32>
    %196 = vector.shape_cast %195 : vector<1x8x128xf32> to vector<8x128xf32>
    %197 = vector.shape_cast %194 : vector<8x128xf32> to vector<1x8x128xf32>
    tpu.vector_store %arg7[%c5_68, %c0_69, %c0_70], %197 {strides = array<i32>} : memref<11x8x128xf32, #tpu.memory_space<vmem>>, vector<1x8x128xf32>,
    %c6 = arith.constant 6 : index
    %c0_71 = arith.constant 0 : index
    %c0_72 = arith.constant 0 : index
    %198 = vector.load %arg0[%c6, %c0_71, %c0_72] : memref<11x8x32xf32, #tpu.memory_space<vmem>>, vector<1x8x32xf32>
    %199 = vector.shape_cast %198 : vector<1x8x32xf32> to vector<8x32xf32>
    %200 = tpu.concatenate %199, %191 in 1 : vector<8x32xf32>, vector<8x32xf32> -> vector<8x64xf32>
    %cst_73 = arith.constant dense<0.000000e+00> : vector<8x128xf32>
    %201 = tpu.matmul %200, %0, %cst_73 {dimension_numbers = #tpu.dot_dimension_numbers<[1], [0], [0], [1], [0, 0, 1, 1], [], []>} : vector<8x64xf32>, vector<64x128xf32>, vector<8x128xf32> -> vector<8x128xf32>
    %202 = vector.broadcast %1 : vector<1x128xf32> to vector<8x128xf32>
    %203 = arith.addf %201, %202 : vector<8x128xf32>
    %204 = arith.negf %203 : vector<8x128xf32>
    %205 = math.exp %204 : vector<8x128xf32>
    %cst_74 = arith.constant 1.000000e+00 : f32
    %206 = vector.broadcast %cst_74 : f32 to vector<8x128xf32>
    %207 = arith.addf %206, %205 : vector<8x128xf32>
    %208 = arith.divf %206, %207 : vector<8x128xf32>
    %cst_75 = arith.constant 2.000000e+00 : f32
    %209 = vector.broadcast %cst_75 : f32 to vector<8x128xf32>
    %210 = arith.mulf %209, %208 : vector<8x128xf32>
    %cst_76 = arith.constant 1.000000e+00 : f32
    %211 = vector.broadcast %cst_76 : f32 to vector<8x128xf32>
    %212 = arith.subf %210, %211 : vector<8x128xf32>
    %213 = arith.select %11, %212, %208 : vector<8x128xi1>, vector<8x128xf32>
    %214 = vector.extract_strided_slice %213 {offsets = [0, 0], sizes = [8, 32], strides = [1, 1]} : vector<8x128xf32> to vector<8x32xf32>
    %215 = vector.extract_strided_slice %213 {offsets = [0, 32], sizes = [8, 32], strides = [1, 1]} : vector<8x128xf32> to vector<8x32xf32>
    %216 = vector.extract_strided_slice %213 {offsets = [0, 64], sizes = [8, 32], strides = [1, 1]} : vector<8x128xf32> to vector<8x32xf32>
    %217 = vector.extract_strided_slice %213 {offsets = [0, 96], sizes = [8, 32], strides = [1, 1]} : vector<8x128xf32> to vector<8x32xf32>
    %218 = arith.mulf %215, %189 : vector<8x32xf32>
    %219 = arith.mulf %214, %216 : vector<8x32xf32>
    %220 = arith.addf %218, %219 : vector<8x32xf32>
    %221 = math.tanh %220 : vector<8x32xf32>
    %222 = arith.mulf %217, %221 : vector<8x32xf32>
    %cst_77 = arith.constant dense<0.000000e+00> : vector<8x128xf32>
    %223 = tpu.matmul %222, %2, %cst_77 {dimension_numbers = #tpu.dot_dimension_numbers<[1], [0], [0], [1], [0, 0, 1, 1], [], []>} : vector<8x32xf32>, vector<32x128xf32>, vector<8x128xf32> -> vector<8x128xf32>
    %224 = vector.broadcast %3 : vector<1x128xf32> to vector<8x128xf32>
    %225 = arith.addf %223, %224 : vector<8x128xf32>
    %c6_78 = arith.constant 6 : index
    %c0_79 = arith.constant 0 : index
    %c0_80 = arith.constant 0 : index
    %226 = vector.load %arg7[%c6_78, %c0_79, %c0_80] : memref<11x8x128xf32, #tpu.memory_space<vmem>>, vector<1x8x128xf32>
    %227 = vector.shape_cast %226 : vector<1x8x128xf32> to vector<8x128xf32>
    %228 = vector.shape_cast %225 : vector<8x128xf32> to vector<1x8x128xf32>
    tpu.vector_store %arg7[%c6_78, %c0_79, %c0_80], %228 {strides = array<i32>} : memref<11x8x128xf32, #tpu.memory_space<vmem>>, vector<1x8x128xf32>,
    %c7 = arith.constant 7 : index
    %c0_81 = arith.constant 0 : index
    %c0_82 = arith.constant 0 : index
    %229 = vector.load %arg0[%c7, %c0_81, %c0_82] : memref<11x8x32xf32, #tpu.memory_space<vmem>>, vector<1x8x32xf32>
    %230 = vector.shape_cast %229 : vector<1x8x32xf32> to vector<8x32xf32>
    %231 = tpu.concatenate %230, %222 in 1 : vector<8x32xf32>, vector<8x32xf32> -> vector<8x64xf32>
    %cst_83 = arith.constant dense<0.000000e+00> : vector<8x128xf32>
    %232 = tpu.matmul %231, %0, %cst_83 {dimension_numbers = #tpu.dot_dimension_numbers<[1], [0], [0], [1], [0, 0, 1, 1], [], []>} : vector<8x64xf32>, vector<64x128xf32>, vector<8x128xf32> -> vector<8x128xf32>
    %233 = vector.broadcast %1 : vector<1x128xf32> to vector<8x128xf32>
    %234 = arith.addf %232, %233 : vector<8x128xf32>
    %235 = arith.negf %234 : vector<8x128xf32>
    %236 = math.exp %235 : vector<8x128xf32>
    %cst_84 = arith.constant 1.000000e+00 : f32
    %237 = vector.broadcast %cst_84 : f32 to vector<8x128xf32>
    %238 = arith.addf %237, %236 : vector<8x128xf32>
    %239 = arith.divf %237, %238 : vector<8x128xf32>
    %cst_85 = arith.constant 2.000000e+00 : f32
    %240 = vector.broadcast %cst_85 : f32 to vector<8x128xf32>
    %241 = arith.mulf %240, %239 : vector<8x128xf32>
    %cst_86 = arith.constant 1.000000e+00 : f32
    %242 = vector.broadcast %cst_86 : f32 to vector<8x128xf32>
    %243 = arith.subf %241, %242 : vector<8x128xf32>
    %244 = arith.select %11, %243, %239 : vector<8x128xi1>, vector<8x128xf32>
    %245 = vector.extract_strided_slice %244 {offsets = [0, 0], sizes = [8, 32], strides = [1, 1]} : vector<8x128xf32> to vector<8x32xf32>
    %246 = vector.extract_strided_slice %244 {offsets = [0, 32], sizes = [8, 32], strides = [1, 1]} : vector<8x128xf32> to vector<8x32xf32>
    %247 = vector.extract_strided_slice %244 {offsets = [0, 64], sizes = [8, 32], strides = [1, 1]} : vector<8x128xf32> to vector<8x32xf32>
    %248 = vector.extract_strided_slice %244 {offsets = [0, 96], sizes = [8, 32], strides = [1, 1]} : vector<8x128xf32> to vector<8x32xf32>
    %249 = arith.mulf %246, %220 : vector<8x32xf32>
    %250 = arith.mulf %245, %247 : vector<8x32xf32>
    %251 = arith.addf %249, %250 : vector<8x32xf32>
    %252 = math.tanh %251 : vector<8x32xf32>
    %253 = arith.mulf %248, %252 : vector<8x32xf32>
    %cst_87 = arith.constant dense<0.000000e+00> : vector<8x128xf32>
    %254 = tpu.matmul %253, %2, %cst_87 {dimension_numbers = #tpu.dot_dimension_numbers<[1], [0], [0], [1], [0, 0, 1, 1], [], []>} : vector<8x32xf32>, vector<32x128xf32>, vector<8x128xf32> -> vector<8x128xf32>
    %255 = vector.broadcast %3 : vector<1x128xf32> to vector<8x128xf32>
    %256 = arith.addf %254, %255 : vector<8x128xf32>
    %c7_88 = arith.constant 7 : index
    %c0_89 = arith.constant 0 : index
    %c0_90 = arith.constant 0 : index
    %257 = vector.load %arg7[%c7_88, %c0_89, %c0_90] : memref<11x8x128xf32, #tpu.memory_space<vmem>>, vector<1x8x128xf32>
    %258 = vector.shape_cast %257 : vector<1x8x128xf32> to vector<8x128xf32>
    %259 = vector.shape_cast %256 : vector<8x128xf32> to vector<1x8x128xf32>
    tpu.vector_store %arg7[%c7_88, %c0_89, %c0_90], %259 {strides = array<i32>} : memref<11x8x128xf32, #tpu.memory_space<vmem>>, vector<1x8x128xf32>,
    %c8 = arith.constant 8 : index
    %c0_91 = arith.constant 0 : index
    %c0_92 = arith.constant 0 : index
    %260 = vector.load %arg0[%c8, %c0_91, %c0_92] : memref<11x8x32xf32, #tpu.memory_space<vmem>>, vector<1x8x32xf32>
    %261 = vector.shape_cast %260 : vector<1x8x32xf32> to vector<8x32xf32>
    %262 = tpu.concatenate %261, %253 in 1 : vector<8x32xf32>, vector<8x32xf32> -> vector<8x64xf32>
    %cst_93 = arith.constant dense<0.000000e+00> : vector<8x128xf32>
    %263 = tpu.matmul %262, %0, %cst_93 {dimension_numbers = #tpu.dot_dimension_numbers<[1], [0], [0], [1], [0, 0, 1, 1], [], []>} : vector<8x64xf32>, vector<64x128xf32>, vector<8x128xf32> -> vector<8x128xf32>
    %264 = vector.broadcast %1 : vector<1x128xf32> to vector<8x128xf32>
    %265 = arith.addf %263, %264 : vector<8x128xf32>
    %266 = arith.negf %265 : vector<8x128xf32>
    %267 = math.exp %266 : vector<8x128xf32>
    %cst_94 = arith.constant 1.000000e+00 : f32
    %268 = vector.broadcast %cst_94 : f32 to vector<8x128xf32>
    %269 = arith.addf %268, %267 : vector<8x128xf32>
    %270 = arith.divf %268, %269 : vector<8x128xf32>
    %cst_95 = arith.constant 2.000000e+00 : f32
    %271 = vector.broadcast %cst_95 : f32 to vector<8x128xf32>
    %272 = arith.mulf %271, %270 : vector<8x128xf32>
    %cst_96 = arith.constant 1.000000e+00 : f32
    %273 = vector.broadcast %cst_96 : f32 to vector<8x128xf32>
    %274 = arith.subf %272, %273 : vector<8x128xf32>
    %275 = arith.select %11, %274, %270 : vector<8x128xi1>, vector<8x128xf32>
    %276 = vector.extract_strided_slice %275 {offsets = [0, 0], sizes = [8, 32], strides = [1, 1]} : vector<8x128xf32> to vector<8x32xf32>
    %277 = vector.extract_strided_slice %275 {offsets = [0, 32], sizes = [8, 32], strides = [1, 1]} : vector<8x128xf32> to vector<8x32xf32>
    %278 = vector.extract_strided_slice %275 {offsets = [0, 64], sizes = [8, 32], strides = [1, 1]} : vector<8x128xf32> to vector<8x32xf32>
    %279 = vector.extract_strided_slice %275 {offsets = [0, 96], sizes = [8, 32], strides = [1, 1]} : vector<8x128xf32> to vector<8x32xf32>
    %280 = arith.mulf %277, %251 : vector<8x32xf32>
    %281 = arith.mulf %276, %278 : vector<8x32xf32>
    %282 = arith.addf %280, %281 : vector<8x32xf32>
    %283 = math.tanh %282 : vector<8x32xf32>
    %284 = arith.mulf %279, %283 : vector<8x32xf32>
    %cst_97 = arith.constant dense<0.000000e+00> : vector<8x128xf32>
    %285 = tpu.matmul %284, %2, %cst_97 {dimension_numbers = #tpu.dot_dimension_numbers<[1], [0], [0], [1], [0, 0, 1, 1], [], []>} : vector<8x32xf32>, vector<32x128xf32>, vector<8x128xf32> -> vector<8x128xf32>
    %286 = vector.broadcast %3 : vector<1x128xf32> to vector<8x128xf32>
    %287 = arith.addf %285, %286 : vector<8x128xf32>
    %c8_98 = arith.constant 8 : index
    %c0_99 = arith.constant 0 : index
    %c0_100 = arith.constant 0 : index
    %288 = vector.load %arg7[%c8_98, %c0_99, %c0_100] : memref<11x8x128xf32, #tpu.memory_space<vmem>>, vector<1x8x128xf32>
    %289 = vector.shape_cast %288 : vector<1x8x128xf32> to vector<8x128xf32>
    %290 = vector.shape_cast %287 : vector<8x128xf32> to vector<1x8x128xf32>
    tpu.vector_store %arg7[%c8_98, %c0_99, %c0_100], %290 {strides = array<i32>} : memref<11x8x128xf32, #tpu.memory_space<vmem>>, vector<1x8x128xf32>,
    %c9 = arith.constant 9 : index
    %c0_101 = arith.constant 0 : index
    %c0_102 = arith.constant 0 : index
    %291 = vector.load %arg0[%c9, %c0_101, %c0_102] : memref<11x8x32xf32, #tpu.memory_space<vmem>>, vector<1x8x32xf32>
    %292 = vector.shape_cast %291 : vector<1x8x32xf32> to vector<8x32xf32>
    %293 = tpu.concatenate %292, %284 in 1 : vector<8x32xf32>, vector<8x32xf32> -> vector<8x64xf32>
    %cst_103 = arith.constant dense<0.000000e+00> : vector<8x128xf32>
    %294 = tpu.matmul %293, %0, %cst_103 {dimension_numbers = #tpu.dot_dimension_numbers<[1], [0], [0], [1], [0, 0, 1, 1], [], []>} : vector<8x64xf32>, vector<64x128xf32>, vector<8x128xf32> -> vector<8x128xf32>
    %295 = vector.broadcast %1 : vector<1x128xf32> to vector<8x128xf32>
    %296 = arith.addf %294, %295 : vector<8x128xf32>
    %297 = arith.negf %296 : vector<8x128xf32>
    %298 = math.exp %297 : vector<8x128xf32>
    %cst_104 = arith.constant 1.000000e+00 : f32
    %299 = vector.broadcast %cst_104 : f32 to vector<8x128xf32>
    %300 = arith.addf %299, %298 : vector<8x128xf32>
    %301 = arith.divf %299, %300 : vector<8x128xf32>
    %cst_105 = arith.constant 2.000000e+00 : f32
    %302 = vector.broadcast %cst_105 : f32 to vector<8x128xf32>
    %303 = arith.mulf %302, %301 : vector<8x128xf32>
    %cst_106 = arith.constant 1.000000e+00 : f32
    %304 = vector.broadcast %cst_106 : f32 to vector<8x128xf32>
    %305 = arith.subf %303, %304 : vector<8x128xf32>
    %306 = arith.select %11, %305, %301 : vector<8x128xi1>, vector<8x128xf32>
    %307 = vector.extract_strided_slice %306 {offsets = [0, 0], sizes = [8, 32], strides = [1, 1]} : vector<8x128xf32> to vector<8x32xf32>
    %308 = vector.extract_strided_slice %306 {offsets = [0, 32], sizes = [8, 32], strides = [1, 1]} : vector<8x128xf32> to vector<8x32xf32>
    %309 = vector.extract_strided_slice %306 {offsets = [0, 64], sizes = [8, 32], strides = [1, 1]} : vector<8x128xf32> to vector<8x32xf32>
    %310 = vector.extract_strided_slice %306 {offsets = [0, 96], sizes = [8, 32], strides = [1, 1]} : vector<8x128xf32> to vector<8x32xf32>
    %311 = arith.mulf %308, %282 : vector<8x32xf32>
    %312 = arith.mulf %307, %309 : vector<8x32xf32>
    %313 = arith.addf %311, %312 : vector<8x32xf32>
    %314 = math.tanh %313 : vector<8x32xf32>
    %315 = arith.mulf %310, %314 : vector<8x32xf32>
    %cst_107 = arith.constant dense<0.000000e+00> : vector<8x128xf32>
    %316 = tpu.matmul %315, %2, %cst_107 {dimension_numbers = #tpu.dot_dimension_numbers<[1], [0], [0], [1], [0, 0, 1, 1], [], []>} : vector<8x32xf32>, vector<32x128xf32>, vector<8x128xf32> -> vector<8x128xf32>
    %317 = vector.broadcast %3 : vector<1x128xf32> to vector<8x128xf32>
    %318 = arith.addf %316, %317 : vector<8x128xf32>
    %c9_108 = arith.constant 9 : index
    %c0_109 = arith.constant 0 : index
    %c0_110 = arith.constant 0 : index
    %319 = vector.load %arg7[%c9_108, %c0_109, %c0_110] : memref<11x8x128xf32, #tpu.memory_space<vmem>>, vector<1x8x128xf32>
    %320 = vector.shape_cast %319 : vector<1x8x128xf32> to vector<8x128xf32>
    %321 = vector.shape_cast %318 : vector<8x128xf32> to vector<1x8x128xf32>
    tpu.vector_store %arg7[%c9_108, %c0_109, %c0_110], %321 {strides = array<i32>} : memref<11x8x128xf32, #tpu.memory_space<vmem>>, vector<1x8x128xf32>,
    %c10 = arith.constant 10 : index
    %c0_111 = arith.constant 0 : index
    %c0_112 = arith.constant 0 : index
    %322 = vector.load %arg0[%c10, %c0_111, %c0_112] : memref<11x8x32xf32, #tpu.memory_space<vmem>>, vector<1x8x32xf32>
    %323 = vector.shape_cast %322 : vector<1x8x32xf32> to vector<8x32xf32>
    %324 = tpu.concatenate %323, %315 in 1 : vector<8x32xf32>, vector<8x32xf32> -> vector<8x64xf32>
    %cst_113 = arith.constant dense<0.000000e+00> : vector<8x128xf32>
    %325 = tpu.matmul %324, %0, %cst_113 {dimension_numbers = #tpu.dot_dimension_numbers<[1], [0], [0], [1], [0, 0, 1, 1], [], []>} : vector<8x64xf32>, vector<64x128xf32>, vector<8x128xf32> -> vector<8x128xf32>
    %326 = vector.broadcast %1 : vector<1x128xf32> to vector<8x128xf32>
    %327 = arith.addf %325, %326 : vector<8x128xf32>
    %328 = arith.negf %327 : vector<8x128xf32>
    %329 = math.exp %328 : vector<8x128xf32>
    %cst_114 = arith.constant 1.000000e+00 : f32
    %330 = vector.broadcast %cst_114 : f32 to vector<8x128xf32>
    %331 = arith.addf %330, %329 : vector<8x128xf32>
    %332 = arith.divf %330, %331 : vector<8x128xf32>
    %cst_115 = arith.constant 2.000000e+00 : f32
    %333 = vector.broadcast %cst_115 : f32 to vector<8x128xf32>
    %334 = arith.mulf %333, %332 : vector<8x128xf32>
    %cst_116 = arith.constant 1.000000e+00 : f32
    %335 = vector.broadcast %cst_116 : f32 to vector<8x128xf32>
    %336 = arith.subf %334, %335 : vector<8x128xf32>
    %337 = arith.select %11, %336, %332 : vector<8x128xi1>, vector<8x128xf32>
    %338 = vector.extract_strided_slice %337 {offsets = [0, 0], sizes = [8, 32], strides = [1, 1]} : vector<8x128xf32> to vector<8x32xf32>
    %339 = vector.extract_strided_slice %337 {offsets = [0, 32], sizes = [8, 32], strides = [1, 1]} : vector<8x128xf32> to vector<8x32xf32>
    %340 = vector.extract_strided_slice %337 {offsets = [0, 64], sizes = [8, 32], strides = [1, 1]} : vector<8x128xf32> to vector<8x32xf32>
    %341 = vector.extract_strided_slice %337 {offsets = [0, 96], sizes = [8, 32], strides = [1, 1]} : vector<8x128xf32> to vector<8x32xf32>
    %342 = arith.mulf %339, %313 : vector<8x32xf32>
    %343 = arith.mulf %338, %340 : vector<8x32xf32>
    %344 = arith.addf %342, %343 : vector<8x32xf32>
    %345 = math.tanh %344 : vector<8x32xf32>
    %346 = arith.mulf %341, %345 : vector<8x32xf32>
    %cst_117 = arith.constant dense<0.000000e+00> : vector<8x128xf32>
    %347 = tpu.matmul %346, %2, %cst_117 {dimension_numbers = #tpu.dot_dimension_numbers<[1], [0], [0], [1], [0, 0, 1, 1], [], []>} : vector<8x32xf32>, vector<32x128xf32>, vector<8x128xf32> -> vector<8x128xf32>
    %348 = vector.broadcast %3 : vector<1x128xf32> to vector<8x128xf32>
    %349 = arith.addf %347, %348 : vector<8x128xf32>
    %c10_118 = arith.constant 10 : index
    %c0_119 = arith.constant 0 : index
    %c0_120 = arith.constant 0 : index
    %350 = vector.load %arg7[%c10_118, %c0_119, %c0_120] : memref<11x8x128xf32, #tpu.memory_space<vmem>>, vector<1x8x128xf32>
    %351 = vector.shape_cast %350 : vector<1x8x128xf32> to vector<8x128xf32>
    %352 = vector.shape_cast %349 : vector<8x128xf32> to vector<1x8x128xf32>
    tpu.vector_store %arg7[%c10_118, %c0_119, %c0_120], %352 {strides = array<i32>} : memref<11x8x128xf32, #tpu.memory_space<vmem>>, vector<1x8x128xf32>,
    %c0_121 = arith.constant 0 : index
    %c0_122 = arith.constant 0 : index
    %353 = vector.load %arg8[%c0_121, %c0_122] : memref<8x32xf32, #tpu.memory_space<vmem>>, vector<8x32xf32>
    tpu.vector_store %arg8[%c0_121, %c0_122], %346 {strides = array<i32>} : memref<8x32xf32, #tpu.memory_space<vmem>>, vector<8x32xf32>,
    %c0_123 = arith.constant 0 : index
    %c0_124 = arith.constant 0 : index
    %354 = vector.load %arg9[%c0_123, %c0_124] : memref<8x32xf32, #tpu.memory_space<vmem>>, vector<8x32xf32>
    tpu.vector_store %arg9[%c0_123, %c0_124], %344 {strides = array<i32>} : memref<8x32xf32, #tpu.memory_space<vmem>>, vector<8x32xf32>,
    return
  }
}

</mosaic_0001>

<llo_original>
// kernel: tpu_custom_call.1
$region0: #{tpu_custom_call.1}
  #allocation0 [shape = 'u32[]', space=smem, size = 0x4, offset = 0x4, fixed_abs, tag = 'smem constant byte address 0x4 - core index']
  #allocation1 [shape = 'u32[144,128]{1,0:T(1,128)}', space=vmem, size = 0x12000, scoped, tag = 'internal scratch']
  %s0 = inlined_call_operand.hbm [shape: f32[11,8,32], index: 0, kind: input, shape index: {}]
  %s1 = inlined_call_operand.hbm [shape: f32[8,32], index: 1, kind: input, shape index: {}]
  %s2 = inlined_call_operand.hbm [shape: f32[8,32], index: 2, kind: input, shape index: {}]
  %s3 = inlined_call_operand.hbm [shape: f32[64,128], index: 3, kind: input, shape index: {}]
  %s4 = inlined_call_operand.vmem [shape: f32[1,128], index: 4, kind: input, shape index: {}]
  %s5 = inlined_call_operand.hbm [shape: f32[32,128], index: 5, kind: input, shape index: {}]
  %s6 = inlined_call_operand.vmem [shape: f32[1,128], index: 6, kind: input, shape index: {}]
  %s7 = inlined_call_operand.hbm [shape: f32[11,8,128], index: 7, kind: output, shape index: {0}]
  %s8 = inlined_call_operand.hbm [shape: f32[8,32], index: 8, kind: output, shape index: {1}]
  %s9 = inlined_call_operand.hbm [shape: f32[8,32], index: 9, kind: output, shape index: {2}]
  %10 = xla_tuple %s7, %s8, %s9
  %s11 = sld [smem:[#allocation0]]
  $region74: #{tpu_custom_call.1} parent=0
    _
  %s13 = ssub.s32 1, %s11
  %s14 = scalar_select 0, %s13, %s11
  $region1: #{tpu_custom_call.1} parent=0
    #allocation2 [shape = 'u8[45056]{0}', space=vmem, size = 0xb000, scoped, tag = 'input window, operand 0, single buffered']
    #allocation3 [shape = 's32[1]{0}', space=sflag, size = 0x4, scoped, tag = 'scoped memory for tpu_custom_call.1']
    #allocation4 [shape = 's32[1]{0}', space=sflag, size = 0x4, scoped, tag = 'scoped memory for tpu_custom_call.1']
    #allocation5 [shape = 'u8[4096]{0}', space=vmem, size = 0x1000, scoped, tag = 'input window, operand 1, single buffered']
    #allocation6 [shape = 's32[1]{0}', space=sflag, size = 0x4, scoped, tag = 'scoped memory for tpu_custom_call.1']
    #allocation7 [shape = 'u8[4096]{0}', space=vmem, size = 0x1000, scoped, tag = 'input window, operand 2, single buffered']
    #allocation8 [shape = 'u8[32768]{0}', space=vmem, size = 0x8000, scoped, tag = 'input window, operand 3, single buffered']
    #allocation9 [shape = 's32[1]{0}', space=sflag, size = 0x4, scoped, tag = 'scoped memory for tpu_custom_call.1']
    #allocation10 [shape = 'u8[16384]{0}', space=vmem, size = 0x4000, scoped, tag = 'input window, operand 5, single buffered']
    #allocation11 [shape = 'u8[45056]{0}', space=vmem, size = 0xb000, scoped, tag = 'output window, operand 0, single buffered']
    #allocation12 [shape = 'u8[4096]{0}', space=vmem, size = 0x1000, scoped, tag = 'output window, operand 1, single buffered']
    #allocation13 [shape = 's32[1]{0}', space=sflag, size = 0x4, scoped, tag = 'scoped memory for tpu_custom_call.1']
    #allocation14 [shape = 'u8[4096]{0}', space=vmem, size = 0x1000, scoped, tag = 'output window, operand 2, single buffered']
    %15 = vsyncpa [#allocation3], 0
    %16 = vsyncpa [#allocation6], 0
    %17 = vsyncpa [#allocation9], 0
    %18 = vsyncpa [#allocation4], 0
    %19 = vsyncpa [#allocation13], 0
    // Predicated region
    $region2: #{tpu_custom_call.1} parent=1 // pred_check
      _
    $region3: #{tpu_custom_call.1} parent=1 // pred_check_branch
      %21 = sbr.rel (0) target = $region5
    $region4: #{tpu_custom_call.1} parent=1 // pred_region
      %s23 = ssub.s32 1408, 1408
      %24 = vsyncadd [#allocation3], %s23
      %s25 = sshll.u32 [#allocation2], 4
      %s26 = int_to_ptr.vmem [resolvable:$true] %s25
      %31 = dma.hbm_to_vmem [thread:$0]  %s0, 1408, %s26, [#allocation3], 128, 128, 8
    $region5: #{tpu_custom_call.1} parent=1 // pred_fallthru
      _
    // Predicated region
    $region6: #{tpu_custom_call.1} parent=1 // pred_check
      _
    $region7: #{tpu_custom_call.1} parent=1 // pred_check_branch
      %33 = sbr.rel (0) target = $region9
    $region8: #{tpu_custom_call.1} parent=1 // pred_region
      %s35 = ssub.s32 128, 128
      %36 = vsyncadd [#allocation6], %s35
      %s38 = sshll.u32 [#allocation5], 4
      %s39 = int_to_ptr.vmem [resolvable:$true] %s38
      %41 = dma.hbm_to_vmem [thread:$0]  %s1, 128, %s39, [#allocation6]
    $region9: #{tpu_custom_call.1} parent=1 // pred_fallthru
      _
    // Predicated region
    $region10: #{tpu_custom_call.1} parent=1 // pred_check
      _
    $region11: #{tpu_custom_call.1} parent=1 // pred_check_branch
      %43 = sbr.rel (0) target = $region13
    $region12: #{tpu_custom_call.1} parent=1 // pred_region
      %s45 = ssub.s32 128, 128
      %46 = vsyncadd [#allocation6], %s45
      %s48 = sshll.u32 [#allocation7], 4
      %s49 = int_to_ptr.vmem [resolvable:$true] %s48
      %51 = dma.hbm_to_vmem [thread:$0]  %s2, 128, %s49, [#allocation6]
    $region13: #{tpu_custom_call.1} parent=1 // pred_fallthru
      _
    // Predicated region
    $region14: #{tpu_custom_call.1} parent=1 // pred_check
      _
    $region15: #{tpu_custom_call.1} parent=1 // pred_check_branch
      %53 = sbr.rel (0) target = $region17
    $region16: #{tpu_custom_call.1} parent=1 // pred_region
      %s55 = ssub.s32 1024, 1024
      %56 = vsyncadd [#allocation9], %s55
      %s57 = sshll.u32 [#allocation8], 4
      %s58 = int_to_ptr.vmem [resolvable:$true] %s57
      %63 = dma.hbm_to_vmem [thread:$0]  %s3, 1024, %s58, [#allocation9], 128, 128, 8
    $region17: #{tpu_custom_call.1} parent=1 // pred_fallthru
      _
    // Predicated region
    $region18: #{tpu_custom_call.1} parent=1 // pred_check
      _
    $region19: #{tpu_custom_call.1} parent=1 // pred_check_branch
      %65 = sbr.rel (0) target = $region21
    $region20: #{tpu_custom_call.1} parent=1 // pred_region
      _
    $region21: #{tpu_custom_call.1} parent=1 // pred_fallthru
      _
    // Predicated region
    $region22: #{tpu_custom_call.1} parent=1 // pred_check
      _
    $region23: #{tpu_custom_call.1} parent=1 // pred_check_branch
      %67 = sbr.rel (0) target = $region25
    $region24: #{tpu_custom_call.1} parent=1 // pred_region
      %s69 = ssub.s32 512, 512
      %70 = vsyncadd [#allocation9], %s69
      %s71 = sshll.u32 [#allocation10], 4
      %s72 = int_to_ptr.vmem [resolvable:$true] %s71
      %77 = dma.hbm_to_vmem [thread:$0]  %s5, 512, %s72, [#allocation9], 128, 128, 8
    $region25: #{tpu_custom_call.1} parent=1 // pred_fallthru
      _
    // Predicated region
    $region26: #{tpu_custom_call.1} parent=1 // pred_check
      _
    $region27: #{tpu_custom_call.1} parent=1 // pred_check_branch
      %79 = sbr.rel (0) target = $region29
    $region28: #{tpu_custom_call.1} parent=1 // pred_region
      _
    $region29: #{tpu_custom_call.1} parent=1 // pred_fallthru
      _
    // Predicated region
    $region30: #{tpu_custom_call.1} parent=1 // pred_check
      _
    $region31: #{tpu_custom_call.1} parent=1 // pred_check_branch
      %81 = sbr.rel (0) target = $region33
    $region32: #{tpu_custom_call.1} parent=1 // pred_region
      %82 = dma.done [#allocation3], 1408
    $region33: #{tpu_custom_call.1} parent=1 // pred_fallthru
      _
    // Predicated region
    $region34: #{tpu_custom_call.1} parent=1 // pred_check
      _
    $region35: #{tpu_custom_call.1} parent=1 // pred_check_branch
      %84 = sbr.rel (0) target = $region37
    $region36: #{tpu_custom_call.1} parent=1 // pred_region
      %85 = dma.done [#allocation6], 128
    $region37: #{tpu_custom_call.1} parent=1 // pred_fallthru
      _
    // Predicated region
    $region38: #{tpu_custom_call.1} parent=1 // pred_check
      _
    $region39: #{tpu_custom_call.1} parent=1 // pred_check_branch
      %87 = sbr.rel (0) target = $region41
    $region40: #{tpu_custom_call.1} parent=1 // pred_region
      %88 = dma.done [#allocation6], 128
    $region41: #{tpu_custom_call.1} parent=1 // pred_fallthru
      _
    // Predicated region
    $region42: #{tpu_custom_call.1} parent=1 // pred_check
      _
    $region43: #{tpu_custom_call.1} parent=1 // pred_check_branch
      %90 = sbr.rel (0) target = $region45
    $region44: #{tpu_custom_call.1} parent=1 // pred_region
      %91 = dma.done [#allocation9], 1024
    $region45: #{tpu_custom_call.1} parent=1 // pred_fallthru
      _
    // Predicated region
    $region46: #{tpu_custom_call.1} parent=1 // pred_check
      _
    $region47: #{tpu_custom_call.1} parent=1 // pred_check_branch
      %93 = sbr.rel (0) target = $region49
    $region48: #{tpu_custom_call.1} parent=1 // pred_region
      %94 = dma.done [#allocation9], 512
    $region49: #{tpu_custom_call.1} parent=1 // pred_fallthru
      _
    %v95 = vld [vmem:[#allocation8] sm:$0xff]
    %v96 = vld [vmem:[#allocation8 + $0x8] sm:$0xff]
    %v97 = vld [vmem:[#allocation8 + $0x10] sm:$0xff]
    %v98 = vld [vmem:[#allocation8 + $0x18] sm:$0xff]
    %v99 = vld [vmem:[#allocation8 + $0x20] sm:$0xff]
    %v100 = vld [vmem:[#allocation8 + $0x28] sm:$0xff]
    %v101 = vld [vmem:[#allocation8 + $0x30] sm:$0xff]
    %v102 = vld [vmem:[#allocation8 + $0x38] sm:$0xff]
    %v103 = vld [vmem:[%s4] sm:$0x1]
    %v104 = vld [vmem:[#allocation10] sm:$0xff]
    %v105 = vld [vmem:[#allocation10 + $0x8] sm:$0xff]
    %v106 = vld [vmem:[#allocation10 + $0x10] sm:$0xff]
    %v107 = vld [vmem:[#allocation10 + $0x18] sm:$0xff]
    %v108 = vld [vmem:[%s6] sm:$0x1]
    %v109 = vld [vmem:[#allocation5] sm:$0xff]
    %v110 = vld [vmem:[#allocation7] sm:$0xff]
    %v111 = vlaneseq
    %v112 = vand.u32 %v111, 127
    %vm113 = vcmp.ge.s32.totalorder %v112, 64
    %vm114 = vcmp.lt.s32.totalorder %v112, 96
    %vm115 = vmand %vm113, %vm114
    %v116 = vld [vmem:[#allocation2] sm:$0xff]
    %118 = vrot.lane.b32.xlu0 %v109, 32
    %v119 = vpop.permute.xlu0 %118
    %vm121 = vcmask 261120
    %v122 = vsel %vm121, %v116, %v119
    %v124 = vlaneseq
    %v125 = vshrl.u32 %v124, 7
    %v126 = vsub.s32 0, %v125
    %v127 = vrot.slane %v103, %v126
    %vm129 = vcmask 523264
    %v131 = vsel %vm129, %v122, 0
    %133 = vmatprep.subr.mxu0 0.0
    %134 = vmatpush1.msra.mxu0 %v95
    %135 = vmatprep.subr.mxu0 0.0
    %136 = vmatpush1.msra.mxu0 %v96
    %137 = vmatprep.subr.mxu0 0.0
    %138 = vmatpush1.msra.mxu0 %v97
    %139 = vmatprep.subr.mxu0 0.0
    %140 = vmatpush1.msra.mxu0 %v98
    %141 = vmatprep.subr.mxu0 0.0
    %142 = vmatpush1.msra.mxu0 %v99
    %143 = vmatprep.subr.mxu0 0.0
    %144 = vmatpush1.msra.mxu0 %v100
    %145 = vmatprep.subr.mxu0 0.0
    %146 = vmatpush1.msra.mxu0 %v101
    %147 = vmatprep.subr.mxu0 0.0
    %148 = vmatpush1.msra.mxu0 %v102
    %149 = vmatprep.subr.mxu0 0.0
    %150 = vmatpush1.msra.mxu0 0.0
    %151 = vmatprep.subr.mxu0 0.0
    %152 = vmatpush1.msra.mxu0 0.0
    %153 = vmatprep.subr.mxu0 0.0
    %154 = vmatpush1.msra.mxu0 0.0
    %155 = vmatprep.subr.mxu0 0.0
    %156 = vmatpush1.msra.mxu0 0.0
    %157 = vmatprep.subr.mxu0 0.0
    %158 = vmatpush1.msra.mxu0 0.0
    %159 = vmatprep.subr.mxu0 0.0
    %160 = vmatpush1.msra.mxu0 0.0
    %161 = vmatprep.subr.mxu0 0.0
    %162 = vmatpush1.msra.mxu0 0.0
    %163 = vmatprep.subr.mxu0 0.0
    %164 = vmatpush1.msra.mxu0 0.0
    %165 = vmatprep.subr.mxu0 0.0
    %166 = vmatpush1.msra.mxu0 0.0
    %167 = vmatprep.subr.mxu0 0.0
    %168 = vmatpush1.msra.mxu0 0.0
    %169 = vmatprep.subr.mxu0 0.0
    %170 = vmatpush1.msra.mxu0 0.0
    %171 = vmatprep.subr.mxu0 0.0
    %172 = vmatpush1.msra.mxu0 0.0
    %173 = vmatprep.subr.mxu0 0.0
    %174 = vmatpush1.msra.mxu0 0.0
    %175 = vmatprep.subr.mxu0 0.0
    %176 = vmatpush1.msra.mxu0 0.0
    %177 = vmatprep.subr.mxu0 0.0
    %178 = vmatpush1.msra.mxu0 0.0
    %179 = vmatprep.subr.mxu0 0.0
    %180 = vmatpush1.msra.mxu0 0.0
    %181 = vmatprep.subr.mxu0 0.0
    %182 = vmatpush1.msra.mxu0 0.0
    %183 = vmatprep.subr.mxu0 0.0
    %184 = vmatpush1.msra.mxu0 0.0
    %185 = vmatprep.subr.mxu0 0.0
    %186 = vmatpush1.msra.mxu0 0.0
    %187 = vmatprep.subr.mxu0 0.0
    %188 = vmatpush1.msra.mxu0 0.0
    %189 = vmatprep.subr.mxu0 0.0
    %190 = vmatpush1.msra.mxu0 0.0
    %191 = vmatprep.subr.mxu0 0.0
    %192 = vmatpush1.msra.mxu0 0.0
    %193 = vmatprep.subr.mxu0 0.0
    %194 = vmatpush1.msra.mxu0 0.0
    %195 = vmatprep.subr.mxu0 0.0
    %196 = vmatpush1.msra.mxu0 0.0
    %197 = vmatprep.mubr.f32.mxu0 0.0
    %198 = vmatmul.mubr.f32.gmra.mrb[0].mxu0 %v131
    %v199 = vpop.f32.mrb[0].mxu0
    %v200 = vadd.f32 %v127, %v199
    %v201 = vpop.f32.mrb[0].mxu0
    %202 = vdwg.mxu0
    %v203 = vxor.u32 %v200, 2147483648
    %v204 = vmul.f32 %v203, 1.442695
    %v205 = vpow.pop %v204
    %v206 = vadd.f32 %v205, 1.0
    %v207 = vrcp.pop %v206
    %v208 = vmul.f32 1.0, %v207
    %v209 = vmul.f32 %v208, 2.0
    %v210 = vsub.f32 %v209, 1.0
    %v211 = vsel %vm115, %v210, %v208
    %213 = vrot.lane.b32.xlu0 %v110, 32
    %v214 = vpop.permute.xlu0 %213
    %v216 = vmul.f32 %v211, %v214
    %218 = vrot.lane.b32.xlu0 %v211, 64
    %v219 = vpop.permute.xlu0 %218
    %v221 = vmul.f32 %v211, %v219
    %223 = vrot.lane.b32.xlu0 %v221, 32
    %v224 = vpop.permute.xlu0 %223
    %v226 = vadd.f32 %v216, %v224
    %v227 = vtanh.pop %v226
    %229 = vrot.lane.b32.xlu0 %v227, 64
    %v230 = vpop.permute.xlu0 %229
    %v232 = vmul.f32 %v211, %v230
    %v234 = vlaneseq
    %v235 = vshrl.u32 %v234, 7
    %v236 = vsub.s32 0, %v235
    %v237 = vrot.slane %v108, %v236
    %240 = vrot.lane.b32.xlu0 %v232, 32
    %v241 = vpop.permute.xlu0 %240
    %v242 = vsel %vm121, %v241, 0
    %244 = vmatprep.subr.mxu0 0.0
    %245 = vmatpush1.msra.mxu0 %v104
    %246 = vmatprep.subr.mxu0 0.0
    %247 = vmatpush1.msra.mxu0 %v105
    %248 = vmatprep.subr.mxu0 0.0
    %249 = vmatpush1.msra.mxu0 %v106
    %250 = vmatprep.subr.mxu0 0.0
    %251 = vmatpush1.msra.mxu0 %v107
    %252 = vmatprep.subr.mxu0 0.0
    %253 = vmatpush1.msra.mxu0 0.0
    %254 = vmatprep.subr.mxu0 0.0
    %255 = vmatpush1.msra.mxu0 0.0
    %256 = vmatprep.subr.mxu0 0.0
    %257 = vmatpush1.msra.mxu0 0.0
    %258 = vmatprep.subr.mxu0 0.0
    %259 = vmatpush1.msra.mxu0 0.0
    %260 = vmatprep.subr.mxu0 0.0
    %261 = vmatpush1.msra.mxu0 0.0
    %262 = vmatprep.subr.mxu0 0.0
    %263 = vmatpush1.msra.mxu0 0.0
    %264 = vmatprep.subr.mxu0 0.0
    %265 = vmatpush1.msra.mxu0 0.0
    %266 = vmatprep.subr.mxu0 0.0
    %267 = vmatpush1.msra.mxu0 0.0
    %268 = vmatprep.subr.mxu0 0.0
    %269 = vmatpush1.msra.mxu0 0.0
    %270 = vmatprep.subr.mxu0 0.0
    %271 = vmatpush1.msra.mxu0 0.0
    %272 = vmatprep.subr.mxu0 0.0
    %273 = vmatpush1.msra.mxu0 0.0
    %274 = vmatprep.subr.mxu0 0.0
    %275 = vmatpush1.msra.mxu0 0.0
    %276 = vmatprep.subr.mxu0 0.0
    %277 = vmatpush1.msra.mxu0 0.0
    %278 = vmatprep.subr.mxu0 0.0
    %279 = vmatpush1.msra.mxu0 0.0
    %280 = vmatprep.subr.mxu0 0.0
    %281 = vmatpush1.msra.mxu0 0.0
    %282 = vmatprep.subr.mxu0 0.0
    %283 = vmatpush1.msra.mxu0 0.0
    %284 = vmatprep.subr.mxu0 0.0
    %285 = vmatpush1.msra.mxu0 0.0
    %286 = vmatprep.subr.mxu0 0.0
    %287 = vmatpush1.msra.mxu0 0.0
    %288 = vmatprep.subr.mxu0 0.0
    %289 = vmatpush1.msra.mxu0 0.0
    %290 = vmatprep.subr.mxu0 0.0
    %291 = vmatpush1.msra.mxu0 0.0
    %292 = vmatprep.subr.mxu0 0.0
    %293 = vmatpush1.msra.mxu0 0.0
    %294 = vmatprep.subr.mxu0 0.0
    %295 = vmatpush1.msra.mxu0 0.0
    %296 = vmatprep.subr.mxu0 0.0
    %297 = vmatpush1.msra.mxu0 0.0
    %298 = vmatprep.subr.mxu0 0.0
    %299 = vmatpush1.msra.mxu0 0.0
    %300 = vmatprep.subr.mxu0 0.0
    %301 = vmatpush1.msra.mxu0 0.0
    %302 = vmatprep.subr.mxu0 0.0
    %303 = vmatpush1.msra.mxu0 0.0
    %304 = vmatprep.subr.mxu0 0.0
    %305 = vmatpush1.msra.mxu0 0.0
    %306 = vmatprep.subr.mxu0 0.0
    %307 = vmatpush1.msra.mxu0 0.0
    %308 = vmatprep.mubr.f32.mxu0 0.0
    %309 = vmatmul.mubr.f32.gmra.mrb[0].mxu0 %v242
    %v310 = vpop.f32.mrb[0].mxu0
    %v311 = vadd.f32 %v237, %v310
    %v312 = vpop.f32.mrb[0].mxu0
    %313 = vdwg.mxu0
    %314 = vst [vmem:[#allocation11] sm:$0xff] %v311
    %s315 = scalar_lea.vmem [#allocation2], 8
    %v316 = vld [vmem:[%s315] sm:$0xff]
    %317 = vrot.lane.b32.xlu0 %v232, 64
    %v318 = vpop.permute.xlu0 %317
    %v320 = vsel %vm121, %v316, %v318
    %v322 = vsel %vm129, %v320, 0
    %324 = vmatprep.subr.mxu0 0.0
    %325 = vmatpush1.msra.mxu0 %v95
    %326 = vmatprep.subr.mxu0 0.0
    %327 = vmatpush1.msra.mxu0 %v96
    %328 = vmatprep.subr.mxu0 0.0
    %329 = vmatpush1.msra.mxu0 %v97
    %330 = vmatprep.subr.mxu0 0.0
    %331 = vmatpush1.msra.mxu0 %v98
    %332 = vmatprep.subr.mxu0 0.0
    %333 = vmatpush1.msra.mxu0 %v99
    %334 = vmatprep.subr.mxu0 0.0
    %335 = vmatpush1.msra.mxu0 %v100
    %336 = vmatprep.subr.mxu0 0.0
    %337 = vmatpush1.msra.mxu0 %v101
    %338 = vmatprep.subr.mxu0 0.0
    %339 = vmatpush1.msra.mxu0 %v102
    %340 = vmatprep.subr.mxu0 0.0
    %341 = vmatpush1.msra.mxu0 0.0
    %342 = vmatprep.subr.mxu0 0.0
    %343 = vmatpush1.msra.mxu0 0.0
    %344 = vmatprep.subr.mxu0 0.0
    %345 = vmatpush1.msra.mxu0 0.0
    %346 = vmatprep.subr.mxu0 0.0
    %347 = vmatpush1.msra.mxu0 0.0
    %348 = vmatprep.subr.mxu0 0.0
    %349 = vmatpush1.msra.mxu0 0.0
    %350 = vmatprep.subr.mxu0 0.0
    %351 = vmatpush1.msra.mxu0 0.0
    %352 = vmatprep.subr.mxu0 0.0
    %353 = vmatpush1.msra.mxu0 0.0
    %354 = vmatprep.subr.mxu0 0.0
    %355 = vmatpush1.msra.mxu0 0.0
    %356 = vmatprep.subr.mxu0 0.0
    %357 = vmatpush1.msra.mxu0 0.0
    %358 = vmatprep.subr.mxu0 0.0
    %359 = vmatpush1.msra.mxu0 0.0
    %360 = vmatprep.subr.mxu0 0.0
    %361 = vmatpush1.msra.mxu0 0.0
    %362 = vmatprep.subr.mxu0 0.0
    %363 = vmatpush1.msra.mxu0 0.0
    %364 = vmatprep.subr.mxu0 0.0
    %365 = vmatpush1.msra.mxu0 0.0
    %366 = vmatprep.subr.mxu0 0.0
    %367 = vmatpush1.msra.mxu0 0.0
    %368 = vmatprep.subr.mxu0 0.0
    %369 = vmatpush1.msra.mxu0 0.0
    %370 = vmatprep.subr.mxu0 0.0
    %371 = vmatpush1.msra.mxu0 0.0
    %372 = vmatprep.subr.mxu0 0.0
    %373 = vmatpush1.msra.mxu0 0.0
    %374 = vmatprep.subr.mxu0 0.0
    %375 = vmatpush1.msra.mxu0 0.0
    %376 = vmatprep.subr.mxu0 0.0
    %377 = vmatpush1.msra.mxu0 0.0
    %378 = vmatprep.subr.mxu0 0.0
    %379 = vmatpush1.msra.mxu0 0.0
    %380 = vmatprep.subr.mxu0 0.0
    %381 = vmatpush1.msra.mxu0 0.0
    %382 = vmatprep.subr.mxu0 0.0
    %383 = vmatpush1.msra.mxu0 0.0
    %384 = vmatprep.subr.mxu0 0.0
    %385 = vmatpush1.msra.mxu0 0.0
    %386 = vmatprep.subr.mxu0 0.0
    %387 = vmatpush1.msra.mxu0 0.0
    %388 = vmatprep.mubr.f32.mxu0 0.0
    %389 = vmatmul.mubr.f32.gmra.mrb[0].mxu0 %v322
    %v390 = vpop.f32.mrb[0].mxu0
    %v391 = vadd.f32 %v127, %v390
    %v392 = vpop.f32.mrb[0].mxu0
    %393 = vdwg.mxu0
    %v394 = vxor.u32 %v391, 2147483648
    %v395 = vmul.f32 %v394, 1.442695
    %v396 = vpow.pop %v395
    %v397 = vadd.f32 %v396, 1.0
    %v398 = vrcp.pop %v397
    %v399 = vmul.f32 1.0, %v398
    %v400 = vmul.f32 %v399, 2.0
    %v401 = vsub.f32 %v400, 1.0
    %v402 = vsel %vm115, %v401, %v399
    %v403 = vmul.f32 %v402, %v226
    %405 = vrot.lane.b32.xlu0 %v402, 64
    %v406 = vpop.permute.xlu0 %405
    %v408 = vmul.f32 %v402, %v406
    %410 = vrot.lane.b32.xlu0 %v408, 32
    %v411 = vpop.permute.xlu0 %410
    %v413 = vadd.f32 %v403, %v411
    %v414 = vtanh.pop %v413
    %416 = vrot.lane.b32.xlu0 %v414, 64
    %v417 = vpop.permute.xlu0 %416
    %v419 = vmul.f32 %v402, %v417
    %421 = vrot.lane.b32.xlu0 %v419, 32
    %v422 = vpop.permute.xlu0 %421
    %v423 = vsel %vm121, %v422, 0
    %425 = vmatprep.subr.mxu0 0.0
    %426 = vmatpush1.msra.mxu0 %v104
    %427 = vmatprep.subr.mxu0 0.0
    %428 = vmatpush1.msra.mxu0 %v105
    %429 = vmatprep.subr.mxu0 0.0
    %430 = vmatpush1.msra.mxu0 %v106
    %431 = vmatprep.subr.mxu0 0.0
    %432 = vmatpush1.msra.mxu0 %v107
    %433 = vmatprep.subr.mxu0 0.0
    %434 = vmatpush1.msra.mxu0 0.0
    %435 = vmatprep.subr.mxu0 0.0
    %436 = vmatpush1.msra.mxu0 0.0
    %437 = vmatprep.subr.mxu0 0.0
    %438 = vmatpush1.msra.mxu0 0.0
    %439 = vmatprep.subr.mxu0 0.0
    %440 = vmatpush1.msra.mxu0 0.0
    %441 = vmatprep.subr.mxu0 0.0
    %442 = vmatpush1.msra.mxu0 0.0
    %443 = vmatprep.subr.mxu0 0.0
    %444 = vmatpush1.msra.mxu0 0.0
    %445 = vmatprep.subr.mxu0 0.0
    %446 = vmatpush1.msra.mxu0 0.0
    %447 = vmatprep.subr.mxu0 0.0
    %448 = vmatpush1.msra.mxu0 0.0
    %449 = vmatprep.subr.mxu0 0.0
    %450 = vmatpush1.msra.mxu0 0.0
    %451 = vmatprep.subr.mxu0 0.0
    %452 = vmatpush1.msra.mxu0 0.0
    %453 = vmatprep.subr.mxu0 0.0
    %454 = vmatpush1.msra.mxu0 0.0
    %455 = vmatprep.subr.mxu0 0.0
    %456 = vmatpush1.msra.mxu0 0.0
    %457 = vmatprep.subr.mxu0 0.0
    %458 = vmatpush1.msra.mxu0 0.0
    %459 = vmatprep.subr.mxu0 0.0
    %460 = vmatpush1.msra.mxu0 0.0
    %461 = vmatprep.subr.mxu0 0.0
    %462 = vmatpush1.msra.mxu0 0.0
    %463 = vmatprep.subr.mxu0 0.0
    %464 = vmatpush1.msra.mxu0 0.0
    %465 = vmatprep.subr.mxu0 0.0
    %466 = vmatpush1.msra.mxu0 0.0
    %467 = vmatprep.subr.mxu0 0.0
    %468 = vmatpush1.msra.mxu0 0.0
    %469 = vmatprep.subr.mxu0 0.0
    %470 = vmatpush1.msra.mxu0 0.0
    %471 = vmatprep.subr.mxu0 0.0
    %472 = vmatpush1.msra.mxu0 0.0
    %473 = vmatprep.subr.mxu0 0.0
    %474 = vmatpush1.msra.mxu0 0.0
    %475 = vmatprep.subr.mxu0 0.0
    %476 = vmatpush1.msra.mxu0 0.0
    %477 = vmatprep.subr.mxu0 0.0
    %478 = vmatpush1.msra.mxu0 0.0
    %479 = vmatprep.subr.mxu0 0.0
    %480 = vmatpush1.msra.mxu0 0.0
    %481 = vmatprep.subr.mxu0 0.0
    %482 = vmatpush1.msra.mxu0 0.0
    %483 = vmatprep.subr.mxu0 0.0
    %484 = vmatpush1.msra.mxu0 0.0
    %485 = vmatprep.subr.mxu0 0.0
    %486 = vmatpush1.msra.mxu0 0.0
    %487 = vmatprep.subr.mxu0 0.0
    %488 = vmatpush1.msra.mxu0 0.0
    %489 = vmatprep.mubr.f32.mxu0 0.0
    %490 = vmatmul.mubr.f32.gmra.mrb[0].mxu0 %v423
    %v491 = vpop.f32.mrb[0].mxu0
    %v492 = vadd.f32 %v237, %v491
    %v493 = vpop.f32.mrb[0].mxu0
    %494 = vdwg.mxu0
    %s495 = scalar_lea.vmem [#allocation11], 8
    %496 = vst [vmem:[%s495] sm:$0xff] %v492
    %s497 = scalar_lea.vmem [#allocation2], 16
    %v498 = vld [vmem:[%s497] sm:$0xff]
    %499 = vrot.lane.b32.xlu0 %v419, 64
    %v500 = vpop.permute.xlu0 %499
    %v502 = vsel %vm121, %v498, %v500
    %v504 = vsel %vm129, %v502, 0
    %506 = vmatprep.subr.mxu0 0.0
    %507 = vmatpush1.msra.mxu0 %v95
    %508 = vmatprep.subr.mxu0 0.0
    %509 = vmatpush1.msra.mxu0 %v96
    %510 = vmatprep.subr.mxu0 0.0
    %511 = vmatpush1.msra.mxu0 %v97
    %512 = vmatprep.subr.mxu0 0.0
    %513 = vmatpush1.msra.mxu0 %v98
    %514 = vmatprep.subr.mxu0 0.0
    %515 = vmatpush1.msra.mxu0 %v99
    %516 = vmatprep.subr.mxu0 0.0
    %517 = vmatpush1.msra.mxu0 %v100
    %518 = vmatprep.subr.mxu0 0.0
    %519 = vmatpush1.msra.mxu0 %v101
    %520 = vmatprep.subr.mxu0 0.0
    %521 = vmatpush1.msra.mxu0 %v102
    %522 = vmatprep.subr.mxu0 0.0
    %523 = vmatpush1.msra.mxu0 0.0
    %524 = vmatprep.subr.mxu0 0.0
    %525 = vmatpush1.msra.mxu0 0.0
    %526 = vmatprep.subr.mxu0 0.0
    %527 = vmatpush1.msra.mxu0 0.0
    %528 = vmatprep.subr.mxu0 0.0
    %529 = vmatpush1.msra.mxu0 0.0
    %530 = vmatprep.subr.mxu0 0.0
    %531 = vmatpush1.msra.mxu0 0.0
    %532 = vmatprep.subr.mxu0 0.0
    %533 = vmatpush1.msra.mxu0 0.0
    %534 = vmatprep.subr.mxu0 0.0
    %535 = vmatpush1.msra.mxu0 0.0
    %536 = vmatprep.subr.mxu0 0.0
    %537 = vmatpush1.msra.mxu0 0.0
    %538 = vmatprep.subr.mxu0 0.0
    %539 = vmatpush1.msra.mxu0 0.0
    %540 = vmatprep.subr.mxu0 0.0
    %541 = vmatpush1.msra.mxu0 0.0
    %542 = vmatprep.subr.mxu0 0.0
    %543 = vmatpush1.msra.mxu0 0.0
    %544 = vmatprep.subr.mxu0 0.0
    %545 = vmatpush1.msra.mxu0 0.0
    %546 = vmatprep.subr.mxu0 0.0
    %547 = vmatpush1.msra.mxu0 0.0
    %548 = vmatprep.subr.mxu0 0.0
    %549 = vmatpush1.msra.mxu0 0.0
    %550 = vmatprep.subr.mxu0 0.0
    %551 = vmatpush1.msra.mxu0 0.0
    %552 = vmatprep.subr.mxu0 0.0
    %553 = vmatpush1.msra.mxu0 0.0
    %554 = vmatprep.subr.mxu0 0.0
    %555 = vmatpush1.msra.mxu0 0.0
    %556 = vmatprep.subr.mxu0 0.0
    %557 = vmatpush1.msra.mxu0 0.0
    %558 = vmatprep.subr.mxu0 0.0
    %559 = vmatpush1.msra.mxu0 0.0
    %560 = vmatprep.subr.mxu0 0.0
    %561 = vmatpush1.msra.mxu0 0.0
    %562 = vmatprep.subr.mxu0 0.0
    %563 = vmatpush1.msra.mxu0 0.0
    %564 = vmatprep.subr.mxu0 0.0
    %565 = vmatpush1.msra.mxu0 0.0
    %566 = vmatprep.subr.mxu0 0.0
    %567 = vmatpush1.msra.mxu0 0.0
    %568 = vmatprep.subr.mxu0 0.0
    %569 = vmatpush1.msra.mxu0 0.0
    %570 = vmatprep.mubr.f32.mxu0 0.0
    %571 = vmatmul.mubr.f32.gmra.mrb[0].mxu0 %v504
    %v572 = vpop.f32.mrb[0].mxu0
    %v573 = vadd.f32 %v127, %v572
    %v574 = vpop.f32.mrb[0].mxu0
    %575 = vdwg.mxu0
    %v576 = vxor.u32 %v573, 2147483648
    %v577 = vmul.f32 %v576, 1.442695
    %v578 = vpow.pop %v577
    %v579 = vadd.f32 %v578, 1.0
    %v580 = vrcp.pop %v579
    %v581 = vmul.f32 1.0, %v580
    %v582 = vmul.f32 %v581, 2.0
    %v583 = vsub.f32 %v582, 1.0
    %v584 = vsel %vm115, %v583, %v581
    %v585 = vmul.f32 %v584, %v413
    %587 = vrot.lane.b32.xlu0 %v584, 64
    %v588 = vpop.permute.xlu0 %587
    %v590 = vmul.f32 %v584, %v588
    %592 = vrot.lane.b32.xlu0 %v590, 32
    %v593 = vpop.permute.xlu0 %592
    %v595 = vadd.f32 %v585, %v593
    %v596 = vtanh.pop %v595
    %598 = vrot.lane.b32.xlu0 %v596, 64
    %v599 = vpop.permute.xlu0 %598
    %v601 = vmul.f32 %v584, %v599
    %603 = vrot.lane.b32.xlu0 %v601, 32
    %v604 = vpop.permute.xlu0 %603
    %v605 = vsel %vm121, %v604, 0
    %607 = vmatprep.subr.mxu0 0.0
    %608 = vmatpush1.msra.mxu0 %v104
    %609 = vmatprep.subr.mxu0 0.0
    %610 = vmatpush1.msra.mxu0 %v105
    %611 = vmatprep.subr.mxu0 0.0
    %612 = vmatpush1.msra.mxu0 %v106
    %613 = vmatprep.subr.mxu0 0.0
    %614 = vmatpush1.msra.mxu0 %v107
    %615 = vmatprep.subr.mxu0 0.0
    %616 = vmatpush1.msra.mxu0 0.0
    %617 = vmatprep.subr.mxu0 0.0
    %618 = vmatpush1.msra.mxu0 0.0
    %619 = vmatprep.subr.mxu0 0.0
    %620 = vmatpush1.msra.mxu0 0.0
    %621 = vmatprep.subr.mxu0 0.0
    %622 = vmatpush1.msra.mxu0 0.0
    %623 = vmatprep.subr.mxu0 0.0
    %624 = vmatpush1.msra.mxu0 0.0
    %625 = vmatprep.subr.mxu0 0.0
    %626 = vmatpush1.msra.mxu0 0.0
    %627 = vmatprep.subr.mxu0 0.0
    %628 = vmatpush1.msra.mxu0 0.0
    %629 = vmatprep.subr.mxu0 0.0
    %630 = vmatpush1.msra.mxu0 0.0
    %631 = vmatprep.subr.mxu0 0.0
    %632 = vmatpush1.msra.mxu0 0.0
    %633 = vmatprep.subr.mxu0 0.0
    %634 = vmatpush1.msra.mxu0 0.0
    %635 = vmatprep.subr.mxu0 0.0
    %636 = vmatpush1.msra.mxu0 0.0
    %637 = vmatprep.subr.mxu0 0.0
    %638 = vmatpush1.msra.mxu0 0.0
    %639 = vmatprep.subr.mxu0 0.0
    %640 = vmatpush1.msra.mxu0 0.0
    %641 = vmatprep.subr.mxu0 0.0
    %642 = vmatpush1.msra.mxu0 0.0
    %643 = vmatprep.subr.mxu0 0.0
    %644 = vmatpush1.msra.mxu0 0.0
    %645 = vmatprep.subr.mxu0 0.0
    %646 = vmatpush1.msra.mxu0 0.0
    %647 = vmatprep.subr.mxu0 0.0
    %648 = vmatpush1.msra.mxu0 0.0
    %649 = vmatprep.subr.mxu0 0.0
    %650 = vmatpush1.msra.mxu0 0.0
    %651 = vmatprep.subr.mxu0 0.0
    %652 = vmatpush1.msra.mxu0 0.0
    %653 = vmatprep.subr.mxu0 0.0
    %654 = vmatpush1.msra.mxu0 0.0
    %655 = vmatprep.subr.mxu0 0.0
    %656 = vmatpush1.msra.mxu0 0.0
    %657 = vmatprep.subr.mxu0 0.0
    %658 = vmatpush1.msra.mxu0 0.0
    %659 = vmatprep.subr.mxu0 0.0
    %660 = vmatpush1.msra.mxu0 0.0
    %661 = vmatprep.subr.mxu0 0.0
    %662 = vmatpush1.msra.mxu0 0.0
    %663 = vmatprep.subr.mxu0 0.0
    %664 = vmatpush1.msra.mxu0 0.0
    %665 = vmatprep.subr.mxu0 0.0
    %666 = vmatpush1.msra.mxu0 0.0
    %667 = vmatprep.subr.mxu0 0.0
    %668 = vmatpush1.msra.mxu0 0.0
    %669 = vmatprep.subr.mxu0 0.0
    %670 = vmatpush1.msra.mxu0 0.0
    %671 = vmatprep.mubr.f32.mxu0 0.0
    %672 = vmatmul.mubr.f32.gmra.mrb[0].mxu0 %v605
    %v673 = vpop.f32.mrb[0].mxu0
    %v674 = vadd.f32 %v237, %v673
    %v675 = vpop.f32.mrb[0].mxu0
    %676 = vdwg.mxu0
    %s677 = scalar_lea.vmem [#allocation11], 16
    %678 = vst [vmem:[%s677] sm:$0xff] %v674
    %s679 = scalar_lea.vmem [#allocation2], 24
    %v680 = vld [vmem:[%s679] sm:$0xff]
    %681 = vrot.lane.b32.xlu0 %v601, 64
    %v682 = vpop.permute.xlu0 %681
    %v684 = vsel %vm121, %v680, %v682
    %v686 = vsel %vm129, %v684, 0
    %688 = vmatprep.subr.mxu0 0.0
    %689 = vmatpush1.msra.mxu0 %v95
    %690 = vmatprep.subr.mxu0 0.0
    %691 = vmatpush1.msra.mxu0 %v96
    %692 = vmatprep.subr.mxu0 0.0
    %693 = vmatpush1.msra.mxu0 %v97
    %694 = vmatprep.subr.mxu0 0.0
    %695 = vmatpush1.msra.mxu0 %v98
    %696 = vmatprep.subr.mxu0 0.0
    %697 = vmatpush1.msra.mxu0 %v99
    %698 = vmatprep.subr.mxu0 0.0
    %699 = vmatpush1.msra.mxu0 %v100
    %700 = vmatprep.subr.mxu0 0.0
    %701 = vmatpush1.msra.mxu0 %v101
    %702 = vmatprep.subr.mxu0 0.0
    %703 = vmatpush1.msra.mxu0 %v102
    %704 = vmatprep.subr.mxu0 0.0
    %705 = vmatpush1.msra.mxu0 0.0
    %706 = vmatprep.subr.mxu0 0.0
    %707 = vmatpush1.msra.mxu0 0.0
    %708 = vmatprep.subr.mxu0 0.0
    %709 = vmatpush1.msra.mxu0 0.0
    %710 = vmatprep.subr.mxu0 0.0
    %711 = vmatpush1.msra.mxu0 0.0
    %712 = vmatprep.subr.mxu0 0.0
    %713 = vmatpush1.msra.mxu0 0.0
    %714 = vmatprep.subr.mxu0 0.0
    %715 = vmatpush1.msra.mxu0 0.0
    %716 = vmatprep.subr.mxu0 0.0
    %717 = vmatpush1.msra.mxu0 0.0
    %718 = vmatprep.subr.mxu0 0.0
    %719 = vmatpush1.msra.mxu0 0.0
    %720 = vmatprep.subr.mxu0 0.0
    %721 = vmatpush1.msra.mxu0 0.0
    %722 = vmatprep.subr.mxu0 0.0
    %723 = vmatpush1.msra.mxu0 0.0
    %724 = vmatprep.subr.mxu0 0.0
    %725 = vmatpush1.msra.mxu0 0.0
    %726 = vmatprep.subr.mxu0 0.0
    %727 = vmatpush1.msra.mxu0 0.0
    %728 = vmatprep.subr.mxu0 0.0
    %729 = vmatpush1.msra.mxu0 0.0
    %730 = vmatprep.subr.mxu0 0.0
    %731 = vmatpush1.msra.mxu0 0.0
    %732 = vmatprep.subr.mxu0 0.0
    %733 = vmatpush1.msra.mxu0 0.0
    %734 = vmatprep.subr.mxu0 0.0
    %735 = vmatpush1.msra.mxu0 0.0
    %736 = vmatprep.subr.mxu0 0.0
    %737 = vmatpush1.msra.mxu0 0.0
    %738 = vmatprep.subr.mxu0 0.0
    %739 = vmatpush1.msra.mxu0 0.0
    %740 = vmatprep.subr.mxu0 0.0
    %741 = vmatpush1.msra.mxu0 0.0
    %742 = vmatprep.subr.mxu0 0.0
    %743 = vmatpush1.msra.mxu0 0.0
    %744 = vmatprep.subr.mxu0 0.0
    %745 = vmatpush1.msra.mxu0 0.0
    %746 = vmatprep.subr.mxu0 0.0
    %747 = vmatpush1.msra.mxu0 0.0
    %748 = vmatprep.subr.mxu0 0.0
    %749 = vmatpush1.msra.mxu0 0.0
    %750 = vmatprep.subr.mxu0 0.0
    %751 = vmatpush1.msra.mxu0 0.0
    %752 = vmatprep.mubr.f32.mxu0 0.0
    %753 = vmatmul.mubr.f32.gmra.mrb[0].mxu0 %v686
    %v754 = vpop.f32.mrb[0].mxu0
    %v755 = vadd.f32 %v127, %v754
    %v756 = vpop.f32.mrb[0].mxu0
    %757 = vdwg.mxu0
    %v758 = vxor.u32 %v755, 2147483648
    %v759 = vmul.f32 %v758, 1.442695
    %v760 = vpow.pop %v759
    %v761 = vadd.f32 %v760, 1.0
    %v762 = vrcp.pop %v761
    %v763 = vmul.f32 1.0, %v762
    %v764 = vmul.f32 %v763, 2.0
    %v765 = vsub.f32 %v764, 1.0
    %v766 = vsel %vm115, %v765, %v763
    %v767 = vmul.f32 %v766, %v595
    %769 = vrot.lane.b32.xlu0 %v766, 64
    %v770 = vpop.permute.xlu0 %769
    %v772 = vmul.f32 %v766, %v770
    %774 = vrot.lane.b32.xlu0 %v772, 32
    %v775 = vpop.permute.xlu0 %774
    %v777 = vadd.f32 %v767, %v775
    %v778 = vtanh.pop %v777
    %780 = vrot.lane.b32.xlu0 %v778, 64
    %v781 = vpop.permute.xlu0 %780
    %v783 = vmul.f32 %v766, %v781
    %785 = vrot.lane.b32.xlu0 %v783, 32
    %v786 = vpop.permute.xlu0 %785
    %v787 = vsel %vm121, %v786, 0
    %789 = vmatprep.subr.mxu0 0.0
    %790 = vmatpush1.msra.mxu0 %v104
    %791 = vmatprep.subr.mxu0 0.0
    %792 = vmatpush1.msra.mxu0 %v105
    %793 = vmatprep.subr.mxu0 0.0
    %794 = vmatpush1.msra.mxu0 %v106
    %795 = vmatprep.subr.mxu0 0.0
    %796 = vmatpush1.msra.mxu0 %v107
    %797 = vmatprep.subr.mxu0 0.0
    %798 = vmatpush1.msra.mxu0 0.0
    %799 = vmatprep.subr.mxu0 0.0
    %800 = vmatpush1.msra.mxu0 0.0
    %801 = vmatprep.subr.mxu0 0.0
    %802 = vmatpush1.msra.mxu0 0.0
    %803 = vmatprep.subr.mxu0 0.0
    %804 = vmatpush1.msra.mxu0 0.0
    %805 = vmatprep.subr.mxu0 0.0
    %806 = vmatpush1.msra.mxu0 0.0
    %807 = vmatprep.subr.mxu0 0.0
    %808 = vmatpush1.msra.mxu0 0.0
    %809 = vmatprep.subr.mxu0 0.0
    %810 = vmatpush1.msra.mxu0 0.0
    %811 = vmatprep.subr.mxu0 0.0
    %812 = vmatpush1.msra.mxu0 0.0
    %813 = vmatprep.subr.mxu0 0.0
    %814 = vmatpush1.msra.mxu0 0.0
    %815 = vmatprep.subr.mxu0 0.0
    %816 = vmatpush1.msra.mxu0 0.0
    %817 = vmatprep.subr.mxu0 0.0
    %818 = vmatpush1.msra.mxu0 0.0
    %819 = vmatprep.subr.mxu0 0.0
    %820 = vmatpush1.msra.mxu0 0.0
    %821 = vmatprep.subr.mxu0 0.0
    %822 = vmatpush1.msra.mxu0 0.0
    %823 = vmatprep.subr.mxu0 0.0
    %824 = vmatpush1.msra.mxu0 0.0
    %825 = vmatprep.subr.mxu0 0.0
    %826 = vmatpush1.msra.mxu0 0.0
    %827 = vmatprep.subr.mxu0 0.0
    %828 = vmatpush1.msra.mxu0 0.0
    %829 = vmatprep.subr.mxu0 0.0
    %830 = vmatpush1.msra.mxu0 0.0
    %831 = vmatprep.subr.mxu0 0.0
    %832 = vmatpush1.msra.mxu0 0.0
    %833 = vmatprep.subr.mxu0 0.0
    %834 = vmatpush1.msra.mxu0 0.0
    %835 = vmatprep.subr.mxu0 0.0
    %836 = vmatpush1.msra.mxu0 0.0
    %837 = vmatprep.subr.mxu0 0.0
    %838 = vmatpush1.msra.mxu0 0.0
    %839 = vmatprep.subr.mxu0 0.0
    %840 = vmatpush1.msra.mxu0 0.0
    %841 = vmatprep.subr.mxu0 0.0
    %842 = vmatpush1.msra.mxu0 0.0
    %843 = vmatprep.subr.mxu0 0.0
    %844 = vmatpush1.msra.mxu0 0.0
    %845 = vmatprep.subr.mxu0 0.0
    %846 = vmatpush1.msra.mxu0 0.0
    %847 = vmatprep.subr.mxu0 0.0
    %848 = vmatpush1.msra.mxu0 0.0
    %849 = vmatprep.subr.mxu0 0.0
    %850 = vmatpush1.msra.mxu0 0.0
    %851 = vmatprep.subr.mxu0 0.0
    %852 = vmatpush1.msra.mxu0 0.0
    %853 = vmatprep.mubr.f32.mxu0 0.0
    %854 = vmatmul.mubr.f32.gmra.mrb[0].mxu0 %v787
    %v855 = vpop.f32.mrb[0].mxu0
    %v856 = vadd.f32 %v237, %v855
    %v857 = vpop.f32.mrb[0].mxu0
    %858 = vdwg.mxu0
    %s859 = scalar_lea.vmem [#allocation11], 24
    %860 = vst [vmem:[%s859] sm:$0xff] %v856
    %s861 = scalar_lea.vmem [#allocation2], 32
    %v862 = vld [vmem:[%s861] sm:$0xff]
    %863 = vrot.lane.b32.xlu0 %v783, 64
    %v864 = vpop.permute.xlu0 %863
    %v866 = vsel %vm121, %v862, %v864
    %v868 = vsel %vm129, %v866, 0
    %870 = vmatprep.subr.mxu0 0.0
    %871 = vmatpush1.msra.mxu0 %v95
    %872 = vmatprep.subr.mxu0 0.0
    %873 = vmatpush1.msra.mxu0 %v96
    %874 = vmatprep.subr.mxu0 0.0
    %875 = vmatpush1.msra.mxu0 %v97
    %876 = vmatprep.subr.mxu0 0.0
    %877 = vmatpush1.msra.mxu0 %v98
    %878 = vmatprep.subr.mxu0 0.0
    %879 = vmatpush1.msra.mxu0 %v99
    %880 = vmatprep.subr.mxu0 0.0
    %881 = vmatpush1.msra.mxu0 %v100
    %882 = vmatprep.subr.mxu0 0.0
    %883 = vmatpush1.msra.mxu0 %v101
    %884 = vmatprep.subr.mxu0 0.0
    %885 = vmatpush1.msra.mxu0 %v102
    %886 = vmatprep.subr.mxu0 0.0
    %887 = vmatpush1.msra.mxu0 0.0
    %888 = vmatprep.subr.mxu0 0.0
    %889 = vmatpush1.msra.mxu0 0.0
    %890 = vmatprep.subr.mxu0 0.0
    %891 = vmatpush1.msra.mxu0 0.0
    %892 = vmatprep.subr.mxu0 0.0
    %893 = vmatpush1.msra.mxu0 0.0
    %894 = vmatprep.subr.mxu0 0.0
    %895 = vmatpush1.msra.mxu0 0.0
    %896 = vmatprep.subr.mxu0 0.0
    %897 = vmatpush1.msra.mxu0 0.0
    %898 = vmatprep.subr.mxu0 0.0
    %899 = vmatpush1.msra.mxu0 0.0
    %900 = vmatprep.subr.mxu0 0.0
    %901 = vmatpush1.msra.mxu0 0.0
    %902 = vmatprep.subr.mxu0 0.0
    %903 = vmatpush1.msra.mxu0 0.0
    %904 = vmatprep.subr.mxu0 0.0
    %905 = vmatpush1.msra.mxu0 0.0
    %906 = vmatprep.subr.mxu0 0.0
    %907 = vmatpush1.msra.mxu0 0.0
    %908 = vmatprep.subr.mxu0 0.0
    %909 = vmatpush1.msra.mxu0 0.0
    %910 = vmatprep.subr.mxu0 0.0
    %911 = vmatpush1.msra.mxu0 0.0
    %912 = vmatprep.subr.mxu0 0.0
    %913 = vmatpush1.msra.mxu0 0.0
    %914 = vmatprep.subr.mxu0 0.0
    %915 = vmatpush1.msra.mxu0 0.0
    %916 = vmatprep.subr.mxu0 0.0
    %917 = vmatpush1.msra.mxu0 0.0
    %918 = vmatprep.subr.mxu0 0.0
    %919 = vmatpush1.msra.mxu0 0.0
    %920 = vmatprep.subr.mxu0 0.0
    %921 = vmatpush1.msra.mxu0 0.0
    %922 = vmatprep.subr.mxu0 0.0
    %923 = vmatpush1.msra.mxu0 0.0
    %924 = vmatprep.subr.mxu0 0.0
    %925 = vmatpush1.msra.mxu0 0.0
    %926 = vmatprep.subr.mxu0 0.0
    %927 = vmatpush1.msra.mxu0 0.0
    %928 = vmatprep.subr.mxu0 0.0
    %929 = vmatpush1.msra.mxu0 0.0
    %930 = vmatprep.subr.mxu0 0.0
    %931 = vmatpush1.msra.mxu0 0.0
    %932 = vmatprep.subr.mxu0 0.0
    %933 = vmatpush1.msra.mxu0 0.0
    %934 = vmatprep.mubr.f32.mxu0 0.0
    %935 = vmatmul.mubr.f32.gmra.mrb[0].mxu0 %v868
    %v936 = vpop.f32.mrb[0].mxu0
    %v937 = vadd.f32 %v127, %v936
    %v938 = vpop.f32.mrb[0].mxu0
    %939 = vdwg.mxu0
    %v940 = vxor.u32 %v937, 2147483648
    %v941 = vmul.f32 %v940, 1.442695
    %v942 = vpow.pop %v941
    %v943 = vadd.f32 %v942, 1.0
    %v944 = vrcp.pop %v943
    %v945 = vmul.f32 1.0, %v944
    %v946 = vmul.f32 %v945, 2.0
    %v947 = vsub.f32 %v946, 1.0
    %v948 = vsel %vm115, %v947, %v945
    %v949 = vmul.f32 %v948, %v777
    %951 = vrot.lane.b32.xlu0 %v948, 64
    %v952 = vpop.permute.xlu0 %951
    %v954 = vmul.f32 %v948, %v952
    %956 = vrot.lane.b32.xlu0 %v954, 32
    %v957 = vpop.permute.xlu0 %956
    %v959 = vadd.f32 %v949, %v957
    %v960 = vtanh.pop %v959
    %962 = vrot.lane.b32.xlu0 %v960, 64
    %v963 = vpop.permute.xlu0 %962
    %v965 = vmul.f32 %v948, %v963
    %967 = vrot.lane.b32.xlu0 %v965, 32
    %v968 = vpop.permute.xlu0 %967
    %v969 = vsel %vm121, %v968, 0
    %971 = vmatprep.subr.mxu0 0.0
    %972 = vmatpush1.msra.mxu0 %v104
    %973 = vmatprep.subr.mxu0 0.0
    %974 = vmatpush1.msra.mxu0 %v105
    %975 = vmatprep.subr.mxu0 0.0
    %976 = vmatpush1.msra.mxu0 %v106
    %977 = vmatprep.subr.mxu0 0.0
    %978 = vmatpush1.msra.mxu0 %v107
    %979 = vmatprep.subr.mxu0 0.0
    %980 = vmatpush1.msra.mxu0 0.0
    %981 = vmatprep.subr.mxu0 0.0
    %982 = vmatpush1.msra.mxu0 0.0
    %983 = vmatprep.subr.mxu0 0.0
    %984 = vmatpush1.msra.mxu0 0.0
    %985 = vmatprep.subr.mxu0 0.0
    %986 = vmatpush1.msra.mxu0 0.0
    %987 = vmatprep.subr.mxu0 0.0
    %988 = vmatpush1.msra.mxu0 0.0
    %989 = vmatprep.subr.mxu0 0.0
    %990 = vmatpush1.msra.mxu0 0.0
    %991 = vmatprep.subr.mxu0 0.0
    %992 = vmatpush1.msra.mxu0 0.0
    %993 = vmatprep.subr.mxu0 0.0
    %994 = vmatpush1.msra.mxu0 0.0
    %995 = vmatprep.subr.mxu0 0.0
    %996 = vmatpush1.msra.mxu0 0.0
    %997 = vmatprep.subr.mxu0 0.0
    %998 = vmatpush1.msra.mxu0 0.0
    %999 = vmatprep.subr.mxu0 0.0
    %1000 = vmatpush1.msra.mxu0 0.0
    %1001 = vmatprep.subr.mxu0 0.0
    %1002 = vmatpush1.msra.mxu0 0.0
    %1003 = vmatprep.subr.mxu0 0.0
    %1004 = vmatpush1.msra.mxu0 0.0
    %1005 = vmatprep.subr.mxu0 0.0
    %1006 = vmatpush1.msra.mxu0 0.0
    %1007 = vmatprep.subr.mxu0 0.0
    %1008 = vmatpush1.msra.mxu0 0.0
    %1009 = vmatprep.subr.mxu0 0.0
    %1010 = vmatpush1.msra.mxu0 0.0
    %1011 = vmatprep.subr.mxu0 0.0
    %1012 = vmatpush1.msra.mxu0 0.0
    %1013 = vmatprep.subr.mxu0 0.0
    %1014 = vmatpush1.msra.mxu0 0.0
    %1015 = vmatprep.subr.mxu0 0.0
    %1016 = vmatpush1.msra.mxu0 0.0
    %1017 = vmatprep.subr.mxu0 0.0
    %1018 = vmatpush1.msra.mxu0 0.0
    %1019 = vmatprep.subr.mxu0 0.0
    %1020 = vmatpush1.msra.mxu0 0.0
    %1021 = vmatprep.subr.mxu0 0.0
    %1022 = vmatpush1.msra.mxu0 0.0
    %1023 = vmatprep.subr.mxu0 0.0
    %1024 = vmatpush1.msra.mxu0 0.0
    %1025 = vmatprep.subr.mxu0 0.0
    %1026 = vmatpush1.msra.mxu0 0.0
    %1027 = vmatprep.subr.mxu0 0.0
    %1028 = vmatpush1.msra.mxu0 0.0
    %1029 = vmatprep.subr.mxu0 0.0
    %1030 = vmatpush1.msra.mxu0 0.0
    %1031 = vmatprep.subr.mxu0 0.0
    %1032 = vmatpush1.msra.mxu0 0.0
    %1033 = vmatprep.subr.mxu0 0.0
    %1034 = vmatpush1.msra.mxu0 0.0
    %1035 = vmatprep.mubr.f32.mxu0 0.0
    %1036 = vmatmul.mubr.f32.gmra.mrb[0].mxu0 %v969
    %v1037 = vpop.f32.mrb[0].mxu0
    %v1038 = vadd.f32 %v237, %v1037
    %v1039 = vpop.f32.mrb[0].mxu0
    %1040 = vdwg.mxu0
    %s1041 = scalar_lea.vmem [#allocation11], 32
    %1042 = vst [vmem:[%s1041] sm:$0xff] %v1038
    %s1043 = scalar_lea.vmem [#allocation2], 40
    %v1044 = vld [vmem:[%s1043] sm:$0xff]
    %1045 = vrot.lane.b32.xlu0 %v965, 64
    %v1046 = vpop.permute.xlu0 %1045
    %v1048 = vsel %vm121, %v1044, %v1046
    %v1050 = vsel %vm129, %v1048, 0
    %1052 = vmatprep.subr.mxu0 0.0
    %1053 = vmatpush1.msra.mxu0 %v95
    %1054 = vmatprep.subr.mxu0 0.0
    %1055 = vmatpush1.msra.mxu0 %v96
    %1056 = vmatprep.subr.mxu0 0.0
    %1057 = vmatpush1.msra.mxu0 %v97
    %1058 = vmatprep.subr.mxu0 0.0
    %1059 = vmatpush1.msra.mxu0 %v98
    %1060 = vmatprep.subr.mxu0 0.0
    %1061 = vmatpush1.msra.mxu0 %v99
    %1062 = vmatprep.subr.mxu0 0.0
    %1063 = vmatpush1.msra.mxu0 %v100
    %1064 = vmatprep.subr.mxu0 0.0
    %1065 = vmatpush1.msra.mxu0 %v101
    %1066 = vmatprep.subr.mxu0 0.0
    %1067 = vmatpush1.msra.mxu0 %v102
    %1068 = vmatprep.subr.mxu0 0.0
    %1069 = vmatpush1.msra.mxu0 0.0
    %1070 = vmatprep.subr.mxu0 0.0
    %1071 = vmatpush1.msra.mxu0 0.0
    %1072 = vmatprep.subr.mxu0 0.0
    %1073 = vmatpush1.msra.mxu0 0.0
    %1074 = vmatprep.subr.mxu0 0.0
    %1075 = vmatpush1.msra.mxu0 0.0
    %1076 = vmatprep.subr.mxu0 0.0
    %1077 = vmatpush1.msra.mxu0 0.0
    %1078 = vmatprep.subr.mxu0 0.0
    %1079 = vmatpush1.msra.mxu0 0.0
    %1080 = vmatprep.subr.mxu0 0.0
    %1081 = vmatpush1.msra.mxu0 0.0
    %1082 = vmatprep.subr.mxu0 0.0
    %1083 = vmatpush1.msra.mxu0 0.0
    %1084 = vmatprep.subr.mxu0 0.0
    %1085 = vmatpush1.msra.mxu0 0.0
    %1086 = vmatprep.subr.mxu0 0.0
    %1087 = vmatpush1.msra.mxu0 0.0
    %1088 = vmatprep.subr.mxu0 0.0
    %1089 = vmatpush1.msra.mxu0 0.0
    %1090 = vmatprep.subr.mxu0 0.0
    %1091 = vmatpush1.msra.mxu0 0.0
    %1092 = vmatprep.subr.mxu0 0.0
    %1093 = vmatpush1.msra.mxu0 0.0
    %1094 = vmatprep.subr.mxu0 0.0
    %1095 = vmatpush1.msra.mxu0 0.0
    %1096 = vmatprep.subr.mxu0 0.0
    %1097 = vmatpush1.msra.mxu0 0.0
    %1098 = vmatprep.subr.mxu0 0.0
    %1099 = vmatpush1.msra.mxu0 0.0
    %1100 = vmatprep.subr.mxu0 0.0
    %1101 = vmatpush1.msra.mxu0 0.0
    %1102 = vmatprep.subr.mxu0 0.0
    %1103 = vmatpush1.msra.mxu0 0.0
    %1104 = vmatprep.subr.mxu0 0.0
    %1105 = vmatpush1.msra.mxu0 0.0
    %1106 = vmatprep.subr.mxu0 0.0
    %1107 = vmatpush1.msra.mxu0 0.0
    %1108 = vmatprep.subr.mxu0 0.0
    %1109 = vmatpush1.msra.mxu0 0.0
    %1110 = vmatprep.subr.mxu0 0.0
    %1111 = vmatpush1.msra.mxu0 0.0
    %1112 = vmatprep.subr.mxu0 0.0
    %1113 = vmatpush1.msra.mxu0 0.0
    %1114 = vmatprep.subr.mxu0 0.0
    %1115 = vmatpush1.msra.mxu0 0.0
    %1116 = vmatprep.mubr.f32.mxu0 0.0
    %1117 = vmatmul.mubr.f32.gmra.mrb[0].mxu0 %v1050
    %v1118 = vpop.f32.mrb[0].mxu0
    %v1119 = vadd.f32 %v127, %v1118
    %v1120 = vpop.f32.mrb[0].mxu0
    %1121 = vdwg.mxu0
    %v1122 = vxor.u32 %v1119, 2147483648
    %v1123 = vmul.f32 %v1122, 1.442695
    %v1124 = vpow.pop %v1123
    %v1125 = vadd.f32 %v1124, 1.0
    %v1126 = vrcp.pop %v1125
    %v1127 = vmul.f32 1.0, %v1126
    %v1128 = vmul.f32 %v1127, 2.0
    %v1129 = vsub.f32 %v1128, 1.0
    %v1130 = vsel %vm115, %v1129, %v1127
    %v1131 = vmul.f32 %v1130, %v959
    %1133 = vrot.lane.b32.xlu0 %v1130, 64
    %v1134 = vpop.permute.xlu0 %1133
    %v1136 = vmul.f32 %v1130, %v1134
    %1138 = vrot.lane.b32.xlu0 %v1136, 32
    %v1139 = vpop.permute.xlu0 %1138
    %v1141 = vadd.f32 %v1131, %v1139
    %v1142 = vtanh.pop %v1141
    %1144 = vrot.lane.b32.xlu0 %v1142, 64
    %v1145 = vpop.permute.xlu0 %1144
    %v1147 = vmul.f32 %v1130, %v1145
    %1149 = vrot.lane.b32.xlu0 %v1147, 32
    %v1150 = vpop.permute.xlu0 %1149
    %v1151 = vsel %vm121, %v1150, 0
    %1153 = vmatprep.subr.mxu0 0.0
    %1154 = vmatpush1.msra.mxu0 %v104
    %1155 = vmatprep.subr.mxu0 0.0
    %1156 = vmatpush1.msra.mxu0 %v105
    %1157 = vmatprep.subr.mxu0 0.0
    %1158 = vmatpush1.msra.mxu0 %v106
    %1159 = vmatprep.subr.mxu0 0.0
    %1160 = vmatpush1.msra.mxu0 %v107
    %1161 = vmatprep.subr.mxu0 0.0
    %1162 = vmatpush1.msra.mxu0 0.0
    %1163 = vmatprep.subr.mxu0 0.0
    %1164 = vmatpush1.msra.mxu0 0.0
    %1165 = vmatprep.subr.mxu0 0.0
    %1166 = vmatpush1.msra.mxu0 0.0
    %1167 = vmatprep.subr.mxu0 0.0
    %1168 = vmatpush1.msra.mxu0 0.0
    %1169 = vmatprep.subr.mxu0 0.0
    %1170 = vmatpush1.msra.mxu0 0.0
    %1171 = vmatprep.subr.mxu0 0.0
    %1172 = vmatpush1.msra.mxu0 0.0
    %1173 = vmatprep.subr.mxu0 0.0
    %1174 = vmatpush1.msra.mxu0 0.0
    %1175 = vmatprep.subr.mxu0 0.0
    %1176 = vmatpush1.msra.mxu0 0.0
    %1177 = vmatprep.subr.mxu0 0.0
    %1178 = vmatpush1.msra.mxu0 0.0
    %1179 = vmatprep.subr.mxu0 0.0
    %1180 = vmatpush1.msra.mxu0 0.0
    %1181 = vmatprep.subr.mxu0 0.0
    %1182 = vmatpush1.msra.mxu0 0.0
    %1183 = vmatprep.subr.mxu0 0.0
    %1184 = vmatpush1.msra.mxu0 0.0
    %1185 = vmatprep.subr.mxu0 0.0
    %1186 = vmatpush1.msra.mxu0 0.0
    %1187 = vmatprep.subr.mxu0 0.0
    %1188 = vmatpush1.msra.mxu0 0.0
    %1189 = vmatprep.subr.mxu0 0.0
    %1190 = vmatpush1.msra.mxu0 0.0
    %1191 = vmatprep.subr.mxu0 0.0
    %1192 = vmatpush1.msra.mxu0 0.0
    %1193 = vmatprep.subr.mxu0 0.0
    %1194 = vmatpush1.msra.mxu0 0.0
    %1195 = vmatprep.subr.mxu0 0.0
    %1196 = vmatpush1.msra.mxu0 0.0
    %1197 = vmatprep.subr.mxu0 0.0
    %1198 = vmatpush1.msra.mxu0 0.0
    %1199 = vmatprep.subr.mxu0 0.0
    %1200 = vmatpush1.msra.mxu0 0.0
    %1201 = vmatprep.subr.mxu0 0.0
    %1202 = vmatpush1.msra.mxu0 0.0
    %1203 = vmatprep.subr.mxu0 0.0
    %1204 = vmatpush1.msra.mxu0 0.0
    %1205 = vmatprep.subr.mxu0 0.0
    %1206 = vmatpush1.msra.mxu0 0.0
    %1207 = vmatprep.subr.mxu0 0.0
    %1208 = vmatpush1.msra.mxu0 0.0
    %1209 = vmatprep.subr.mxu0 0.0
    %1210 = vmatpush1.msra.mxu0 0.0
    %1211 = vmatprep.subr.mxu0 0.0
    %1212 = vmatpush1.msra.mxu0 0.0
    %1213 = vmatprep.subr.mxu0 0.0
    %1214 = vmatpush1.msra.mxu0 0.0
    %1215 = vmatprep.subr.mxu0 0.0
    %1216 = vmatpush1.msra.mxu0 0.0
    %1217 = vmatprep.mubr.f32.mxu0 0.0
    %1218 = vmatmul.mubr.f32.gmra.mrb[0].mxu0 %v1151
    %v1219 = vpop.f32.mrb[0].mxu0
    %v1220 = vadd.f32 %v237, %v1219
    %v1221 = vpop.f32.mrb[0].mxu0
    %1222 = vdwg.mxu0
    %s1223 = scalar_lea.vmem [#allocation11], 40
    %1224 = vst [vmem:[%s1223] sm:$0xff] %v1220
    %s1225 = scalar_lea.vmem [#allocation2], 48
    %v1226 = vld [vmem:[%s1225] sm:$0xff]
    %1227 = vrot.lane.b32.xlu0 %v1147, 64
    %v1228 = vpop.permute.xlu0 %1227
    %v1230 = vsel %vm121, %v1226, %v1228
    %v1232 = vsel %vm129, %v1230, 0
    %1234 = vmatprep.subr.mxu0 0.0
    %1235 = vmatpush1.msra.mxu0 %v95
    %1236 = vmatprep.subr.mxu0 0.0
    %1237 = vmatpush1.msra.mxu0 %v96
    %1238 = vmatprep.subr.mxu0 0.0
    %1239 = vmatpush1.msra.mxu0 %v97
    %1240 = vmatprep.subr.mxu0 0.0
    %1241 = vmatpush1.msra.mxu0 %v98
    %1242 = vmatprep.subr.mxu0 0.0
    %1243 = vmatpush1.msra.mxu0 %v99
    %1244 = vmatprep.subr.mxu0 0.0
    %1245 = vmatpush1.msra.mxu0 %v100
    %1246 = vmatprep.subr.mxu0 0.0
    %1247 = vmatpush1.msra.mxu0 %v101
    %1248 = vmatprep.subr.mxu0 0.0
    %1249 = vmatpush1.msra.mxu0 %v102
    %1250 = vmatprep.subr.mxu0 0.0
    %1251 = vmatpush1.msra.mxu0 0.0
    %1252 = vmatprep.subr.mxu0 0.0
    %1253 = vmatpush1.msra.mxu0 0.0
    %1254 = vmatprep.subr.mxu0 0.0
    %1255 = vmatpush1.msra.mxu0 0.0
    %1256 = vmatprep.subr.mxu0 0.0
    %1257 = vmatpush1.msra.mxu0 0.0
    %1258 = vmatprep.subr.mxu0 0.0
    %1259 = vmatpush1.msra.mxu0 0.0
    %1260 = vmatprep.subr.mxu0 0.0
    %1261 = vmatpush1.msra.mxu0 0.0
    %1262 = vmatprep.subr.mxu0 0.0
    %1263 = vmatpush1.msra.mxu0 0.0
    %1264 = vmatprep.subr.mxu0 0.0
    %1265 = vmatpush1.msra.mxu0 0.0
    %1266 = vmatprep.subr.mxu0 0.0
    %1267 = vmatpush1.msra.mxu0 0.0
    %1268 = vmatprep.subr.mxu0 0.0
    %1269 = vmatpush1.msra.mxu0 0.0
    %1270 = vmatprep.subr.mxu0 0.0
    %1271 = vmatpush1.msra.mxu0 0.0
    %1272 = vmatprep.subr.mxu0 0.0
    %1273 = vmatpush1.msra.mxu0 0.0
    %1274 = vmatprep.subr.mxu0 0.0
    %1275 = vmatpush1.msra.mxu0 0.0
    %1276 = vmatprep.subr.mxu0 0.0
    %1277 = vmatpush1.msra.mxu0 0.0
    %1278 = vmatprep.subr.mxu0 0.0
    %1279 = vmatpush1.msra.mxu0 0.0
    %1280 = vmatprep.subr.mxu0 0.0
    %1281 = vmatpush1.msra.mxu0 0.0
    %1282 = vmatprep.subr.mxu0 0.0
    %1283 = vmatpush1.msra.mxu0 0.0
    %1284 = vmatprep.subr.mxu0 0.0
    %1285 = vmatpush1.msra.mxu0 0.0
    %1286 = vmatprep.subr.mxu0 0.0
    %1287 = vmatpush1.msra.mxu0 0.0
    %1288 = vmatprep.subr.mxu0 0.0
    %1289 = vmatpush1.msra.mxu0 0.0
    %1290 = vmatprep.subr.mxu0 0.0
    %1291 = vmatpush1.msra.mxu0 0.0
    %1292 = vmatprep.subr.mxu0 0.0
    %1293 = vmatpush1.msra.mxu0 0.0
    %1294 = vmatprep.subr.mxu0 0.0
    %1295 = vmatpush1.msra.mxu0 0.0
    %1296 = vmatprep.subr.mxu0 0.0
    %1297 = vmatpush1.msra.mxu0 0.0
    %1298 = vmatprep.mubr.f32.mxu0 0.0
    %1299 = vmatmul.mubr.f32.gmra.mrb[0].mxu0 %v1232
    %v1300 = vpop.f32.mrb[0].mxu0
    %v1301 = vadd.f32 %v127, %v1300
    %v1302 = vpop.f32.mrb[0].mxu0
    %1303 = vdwg.mxu0
    %v1304 = vxor.u32 %v1301, 2147483648
    %v1305 = vmul.f32 %v1304, 1.442695
    %v1306 = vpow.pop %v1305
    %v1307 = vadd.f32 %v1306, 1.0
    %v1308 = vrcp.pop %v1307
    %v1309 = vmul.f32 1.0, %v1308
    %v1310 = vmul.f32 %v1309, 2.0
    %v1311 = vsub.f32 %v1310, 1.0
    %v1312 = vsel %vm115, %v1311, %v1309
    %v1313 = vmul.f32 %v1312, %v1141
    %1315 = vrot.lane.b32.xlu0 %v1312, 64
    %v1316 = vpop.permute.xlu0 %1315
    %v1318 = vmul.f32 %v1312, %v1316
    %1320 = vrot.lane.b32.xlu0 %v1318, 32
    %v1321 = vpop.permute.xlu0 %1320
    %v1323 = vadd.f32 %v1313, %v1321
    %v1324 = vtanh.pop %v1323
    %1326 = vrot.lane.b32.xlu0 %v1324, 64
    %v1327 = vpop.permute.xlu0 %1326
    %v1329 = vmul.f32 %v1312, %v1327
    %1331 = vrot.lane.b32.xlu0 %v1329, 32
    %v1332 = vpop.permute.xlu0 %1331
    %v1333 = vsel %vm121, %v1332, 0
    %1335 = vmatprep.subr.mxu0 0.0
    %1336 = vmatpush1.msra.mxu0 %v104
    %1337 = vmatprep.subr.mxu0 0.0
    %1338 = vmatpush1.msra.mxu0 %v105
    %1339 = vmatprep.subr.mxu0 0.0
    %1340 = vmatpush1.msra.mxu0 %v106
    %1341 = vmatprep.subr.mxu0 0.0
    %1342 = vmatpush1.msra.mxu0 %v107
    %1343 = vmatprep.subr.mxu0 0.0
    %1344 = vmatpush1.msra.mxu0 0.0
    %1345 = vmatprep.subr.mxu0 0.0
    %1346 = vmatpush1.msra.mxu0 0.0
    %1347 = vmatprep.subr.mxu0 0.0
    %1348 = vmatpush1.msra.mxu0 0.0
    %1349 = vmatprep.subr.mxu0 0.0
    %1350 = vmatpush1.msra.mxu0 0.0
    %1351 = vmatprep.subr.mxu0 0.0
    %1352 = vmatpush1.msra.mxu0 0.0
    %1353 = vmatprep.subr.mxu0 0.0
    %1354 = vmatpush1.msra.mxu0 0.0
    %1355 = vmatprep.subr.mxu0 0.0
    %1356 = vmatpush1.msra.mxu0 0.0
    %1357 = vmatprep.subr.mxu0 0.0
    %1358 = vmatpush1.msra.mxu0 0.0
    %1359 = vmatprep.subr.mxu0 0.0
    %1360 = vmatpush1.msra.mxu0 0.0
    %1361 = vmatprep.subr.mxu0 0.0
    %1362 = vmatpush1.msra.mxu0 0.0
    %1363 = vmatprep.subr.mxu0 0.0
    %1364 = vmatpush1.msra.mxu0 0.0
    %1365 = vmatprep.subr.mxu0 0.0
    %1366 = vmatpush1.msra.mxu0 0.0
    %1367 = vmatprep.subr.mxu0 0.0
    %1368 = vmatpush1.msra.mxu0 0.0
    %1369 = vmatprep.subr.mxu0 0.0
    %1370 = vmatpush1.msra.mxu0 0.0
    %1371 = vmatprep.subr.mxu0 0.0
    %1372 = vmatpush1.msra.mxu0 0.0
    %1373 = vmatprep.subr.mxu0 0.0
    %1374 = vmatpush1.msra.mxu0 0.0
    %1375 = vmatprep.subr.mxu0 0.0
    %1376 = vmatpush1.msra.mxu0 0.0
    %1377 = vmatprep.subr.mxu0 0.0
    %1378 = vmatpush1.msra.mxu0 0.0
    %1379 = vmatprep.subr.mxu0 0.0
    %1380 = vmatpush1.msra.mxu0 0.0
    %1381 = vmatprep.subr.mxu0 0.0
    %1382 = vmatpush1.msra.mxu0 0.0
    %1383 = vmatprep.subr.mxu0 0.0
    %1384 = vmatpush1.msra.mxu0 0.0
    %1385 = vmatprep.subr.mxu0 0.0
    %1386 = vmatpush1.msra.mxu0 0.0
    %1387 = vmatprep.subr.mxu0 0.0
    %1388 = vmatpush1.msra.mxu0 0.0
    %1389 = vmatprep.subr.mxu0 0.0
    %1390 = vmatpush1.msra.mxu0 0.0
    %1391 = vmatprep.subr.mxu0 0.0
    %1392 = vmatpush1.msra.mxu0 0.0
    %1393 = vmatprep.subr.mxu0 0.0
    %1394 = vmatpush1.msra.mxu0 0.0
    %1395 = vmatprep.subr.mxu0 0.0
    %1396 = vmatpush1.msra.mxu0 0.0
    %1397 = vmatprep.subr.mxu0 0.0
    %1398 = vmatpush1.msra.mxu0 0.0
    %1399 = vmatprep.mubr.f32.mxu0 0.0
    %1400 = vmatmul.mubr.f32.gmra.mrb[0].mxu0 %v1333
    %v1401 = vpop.f32.mrb[0].mxu0
    %v1402 = vadd.f32 %v237, %v1401
    %v1403 = vpop.f32.mrb[0].mxu0
    %1404 = vdwg.mxu0
    %s1405 = scalar_lea.vmem [#allocation11], 48
    %1406 = vst [vmem:[%s1405] sm:$0xff] %v1402
    %s1407 = scalar_lea.vmem [#allocation2], 56
    %v1408 = vld [vmem:[%s1407] sm:$0xff]
    %1409 = vrot.lane.b32.xlu0 %v1329, 64
    %v1410 = vpop.permute.xlu0 %1409
    %v1412 = vsel %vm121, %v1408, %v1410
    %v1414 = vsel %vm129, %v1412, 0
    %1416 = vmatprep.subr.mxu0 0.0
    %1417 = vmatpush1.msra.mxu0 %v95
    %1418 = vmatprep.subr.mxu0 0.0
    %1419 = vmatpush1.msra.mxu0 %v96
    %1420 = vmatprep.subr.mxu0 0.0
    %1421 = vmatpush1.msra.mxu0 %v97
    %1422 = vmatprep.subr.mxu0 0.0
    %1423 = vmatpush1.msra.mxu0 %v98
    %1424 = vmatprep.subr.mxu0 0.0
    %1425 = vmatpush1.msra.mxu0 %v99
    %1426 = vmatprep.subr.mxu0 0.0
    %1427 = vmatpush1.msra.mxu0 %v100
    %1428 = vmatprep.subr.mxu0 0.0
    %1429 = vmatpush1.msra.mxu0 %v101
    %1430 = vmatprep.subr.mxu0 0.0
    %1431 = vmatpush1.msra.mxu0 %v102
    %1432 = vmatprep.subr.mxu0 0.0
    %1433 = vmatpush1.msra.mxu0 0.0
    %1434 = vmatprep.subr.mxu0 0.0
    %1435 = vmatpush1.msra.mxu0 0.0
    %1436 = vmatprep.subr.mxu0 0.0
    %1437 = vmatpush1.msra.mxu0 0.0
    %1438 = vmatprep.subr.mxu0 0.0
    %1439 = vmatpush1.msra.mxu0 0.0
    %1440 = vmatprep.subr.mxu0 0.0
    %1441 = vmatpush1.msra.mxu0 0.0
    %1442 = vmatprep.subr.mxu0 0.0
    %1443 = vmatpush1.msra.mxu0 0.0
    %1444 = vmatprep.subr.mxu0 0.0
    %1445 = vmatpush1.msra.mxu0 0.0
    %1446 = vmatprep.subr.mxu0 0.0
    %1447 = vmatpush1.msra.mxu0 0.0
    %1448 = vmatprep.subr.mxu0 0.0
    %1449 = vmatpush1.msra.mxu0 0.0
    %1450 = vmatprep.subr.mxu0 0.0
    %1451 = vmatpush1.msra.mxu0 0.0
    %1452 = vmatprep.subr.mxu0 0.0
    %1453 = vmatpush1.msra.mxu0 0.0
    %1454 = vmatprep.subr.mxu0 0.0
    %1455 = vmatpush1.msra.mxu0 0.0
    %1456 = vmatprep.subr.mxu0 0.0
    %1457 = vmatpush1.msra.mxu0 0.0
    %1458 = vmatprep.subr.mxu0 0.0
    %1459 = vmatpush1.msra.mxu0 0.0
    %1460 = vmatprep.subr.mxu0 0.0
    %1461 = vmatpush1.msra.mxu0 0.0
    %1462 = vmatprep.subr.mxu0 0.0
    %1463 = vmatpush1.msra.mxu0 0.0
    %1464 = vmatprep.subr.mxu0 0.0
    %1465 = vmatpush1.msra.mxu0 0.0
    %1466 = vmatprep.subr.mxu0 0.0
    %1467 = vmatpush1.msra.mxu0 0.0
    %1468 = vmatprep.subr.mxu0 0.0
    %1469 = vmatpush1.msra.mxu0 0.0
    %1470 = vmatprep.subr.mxu0 0.0
    %1471 = vmatpush1.msra.mxu0 0.0
    %1472 = vmatprep.subr.mxu0 0.0
    %1473 = vmatpush1.msra.mxu0 0.0
    %1474 = vmatprep.subr.mxu0 0.0
    %1475 = vmatpush1.msra.mxu0 0.0
    %1476 = vmatprep.subr.mxu0 0.0
    %1477 = vmatpush1.msra.mxu0 0.0
    %1478 = vmatprep.subr.mxu0 0.0
    %1479 = vmatpush1.msra.mxu0 0.0
    %1480 = vmatprep.mubr.f32.mxu0 0.0
    %1481 = vmatmul.mubr.f32.gmra.mrb[0].mxu0 %v1414
    %v1482 = vpop.f32.mrb[0].mxu0
    %v1483 = vadd.f32 %v127, %v1482
    %v1484 = vpop.f32.mrb[0].mxu0
    %1485 = vdwg.mxu0
    %v1486 = vxor.u32 %v1483, 2147483648
    %v1487 = vmul.f32 %v1486, 1.442695
    %v1488 = vpow.pop %v1487
    %v1489 = vadd.f32 %v1488, 1.0
    %v1490 = vrcp.pop %v1489
    %v1491 = vmul.f32 1.0, %v1490
    %v1492 = vmul.f32 %v1491, 2.0
    %v1493 = vsub.f32 %v1492, 1.0
    %v1494 = vsel %vm115, %v1493, %v1491
    %v1495 = vmul.f32 %v1494, %v1323
    %1497 = vrot.lane.b32.xlu0 %v1494, 64
    %v1498 = vpop.permute.xlu0 %1497
    %v1500 = vmul.f32 %v1494, %v1498
    %1502 = vrot.lane.b32.xlu0 %v1500, 32
    %v1503 = vpop.permute.xlu0 %1502
    %v1505 = vadd.f32 %v1495, %v1503
    %v1506 = vtanh.pop %v1505
    %1508 = vrot.lane.b32.xlu0 %v1506, 64
    %v1509 = vpop.permute.xlu0 %1508
    %v1511 = vmul.f32 %v1494, %v1509
    %1513 = vrot.lane.b32.xlu0 %v1511, 32
    %v1514 = vpop.permute.xlu0 %1513
    %v1515 = vsel %vm121, %v1514, 0
    %1517 = vmatprep.subr.mxu0 0.0
    %1518 = vmatpush1.msra.mxu0 %v104
    %1519 = vmatprep.subr.mxu0 0.0
    %1520 = vmatpush1.msra.mxu0 %v105
    %1521 = vmatprep.subr.mxu0 0.0
    %1522 = vmatpush1.msra.mxu0 %v106
    %1523 = vmatprep.subr.mxu0 0.0
    %1524 = vmatpush1.msra.mxu0 %v107
    %1525 = vmatprep.subr.mxu0 0.0
    %1526 = vmatpush1.msra.mxu0 0.0
    %1527 = vmatprep.subr.mxu0 0.0
    %1528 = vmatpush1.msra.mxu0 0.0
    %1529 = vmatprep.subr.mxu0 0.0
    %1530 = vmatpush1.msra.mxu0 0.0
    %1531 = vmatprep.subr.mxu0 0.0
    %1532 = vmatpush1.msra.mxu0 0.0
    %1533 = vmatprep.subr.mxu0 0.0
    %1534 = vmatpush1.msra.mxu0 0.0
    %1535 = vmatprep.subr.mxu0 0.0
    %1536 = vmatpush1.msra.mxu0 0.0
    %1537 = vmatprep.subr.mxu0 0.0
    %1538 = vmatpush1.msra.mxu0 0.0
    %1539 = vmatprep.subr.mxu0 0.0
    %1540 = vmatpush1.msra.mxu0 0.0
    %1541 = vmatprep.subr.mxu0 0.0
    %1542 = vmatpush1.msra.mxu0 0.0
    %1543 = vmatprep.subr.mxu0 0.0
    %1544 = vmatpush1.msra.mxu0 0.0
    %1545 = vmatprep.subr.mxu0 0.0
    %1546 = vmatpush1.msra.mxu0 0.0
    %1547 = vmatprep.subr.mxu0 0.0
    %1548 = vmatpush1.msra.mxu0 0.0
    %1549 = vmatprep.subr.mxu0 0.0
    %1550 = vmatpush1.msra.mxu0 0.0
    %1551 = vmatprep.subr.mxu0 0.0
    %1552 = vmatpush1.msra.mxu0 0.0
    %1553 = vmatprep.subr.mxu0 0.0
    %1554 = vmatpush1.msra.mxu0 0.0
    %1555 = vmatprep.subr.mxu0 0.0
    %1556 = vmatpush1.msra.mxu0 0.0
    %1557 = vmatprep.subr.mxu0 0.0
    %1558 = vmatpush1.msra.mxu0 0.0
    %1559 = vmatprep.subr.mxu0 0.0
    %1560 = vmatpush1.msra.mxu0 0.0
    %1561 = vmatprep.subr.mxu0 0.0
    %1562 = vmatpush1.msra.mxu0 0.0
    %1563 = vmatprep.subr.mxu0 0.0
    %1564 = vmatpush1.msra.mxu0 0.0
    %1565 = vmatprep.subr.mxu0 0.0
    %1566 = vmatpush1.msra.mxu0 0.0
    %1567 = vmatprep.subr.mxu0 0.0
    %1568 = vmatpush1.msra.mxu0 0.0
    %1569 = vmatprep.subr.mxu0 0.0
    %1570 = vmatpush1.msra.mxu0 0.0
    %1571 = vmatprep.subr.mxu0 0.0
    %1572 = vmatpush1.msra.mxu0 0.0
    %1573 = vmatprep.subr.mxu0 0.0
    %1574 = vmatpush1.msra.mxu0 0.0
    %1575 = vmatprep.subr.mxu0 0.0
    %1576 = vmatpush1.msra.mxu0 0.0
    %1577 = vmatprep.subr.mxu0 0.0
    %1578 = vmatpush1.msra.mxu0 0.0
    %1579 = vmatprep.subr.mxu0 0.0
    %1580 = vmatpush1.msra.mxu0 0.0
    %1581 = vmatprep.mubr.f32.mxu0 0.0
    %1582 = vmatmul.mubr.f32.gmra.mrb[0].mxu0 %v1515
    %v1583 = vpop.f32.mrb[0].mxu0
    %v1584 = vadd.f32 %v237, %v1583
    %v1585 = vpop.f32.mrb[0].mxu0
    %1586 = vdwg.mxu0
    %s1587 = scalar_lea.vmem [#allocation11], 56
    %1588 = vst [vmem:[%s1587] sm:$0xff] %v1584
    %s1589 = scalar_lea.vmem [#allocation2], 64
    %v1590 = vld [vmem:[%s1589] sm:$0xff]
    %1591 = vrot.lane.b32.xlu0 %v1511, 64
    %v1592 = vpop.permute.xlu0 %1591
    %v1594 = vsel %vm121, %v1590, %v1592
    %v1596 = vsel %vm129, %v1594, 0
    %1598 = vmatprep.subr.mxu0 0.0
    %1599 = vmatpush1.msra.mxu0 %v95
    %1600 = vmatprep.subr.mxu0 0.0
    %1601 = vmatpush1.msra.mxu0 %v96
    %1602 = vmatprep.subr.mxu0 0.0
    %1603 = vmatpush1.msra.mxu0 %v97
    %1604 = vmatprep.subr.mxu0 0.0
    %1605 = vmatpush1.msra.mxu0 %v98
    %1606 = vmatprep.subr.mxu0 0.0
    %1607 = vmatpush1.msra.mxu0 %v99
    %1608 = vmatprep.subr.mxu0 0.0
    %1609 = vmatpush1.msra.mxu0 %v100
    %1610 = vmatprep.subr.mxu0 0.0
    %1611 = vmatpush1.msra.mxu0 %v101
    %1612 = vmatprep.subr.mxu0 0.0
    %1613 = vmatpush1.msra.mxu0 %v102
    %1614 = vmatprep.subr.mxu0 0.0
    %1615 = vmatpush1.msra.mxu0 0.0
    %1616 = vmatprep.subr.mxu0 0.0
    %1617 = vmatpush1.msra.mxu0 0.0
    %1618 = vmatprep.subr.mxu0 0.0
    %1619 = vmatpush1.msra.mxu0 0.0
    %1620 = vmatprep.subr.mxu0 0.0
    %1621 = vmatpush1.msra.mxu0 0.0
    %1622 = vmatprep.subr.mxu0 0.0
    %1623 = vmatpush1.msra.mxu0 0.0
    %1624 = vmatprep.subr.mxu0 0.0
    %1625 = vmatpush1.msra.mxu0 0.0
    %1626 = vmatprep.subr.mxu0 0.0
    %1627 = vmatpush1.msra.mxu0 0.0
    %1628 = vmatprep.subr.mxu0 0.0
    %1629 = vmatpush1.msra.mxu0 0.0
    %1630 = vmatprep.subr.mxu0 0.0
    %1631 = vmatpush1.msra.mxu0 0.0
    %1632 = vmatprep.subr.mxu0 0.0
    %1633 = vmatpush1.msra.mxu0 0.0
    %1634 = vmatprep.subr.mxu0 0.0
    %1635 = vmatpush1.msra.mxu0 0.0
    %1636 = vmatprep.subr.mxu0 0.0
    %1637 = vmatpush1.msra.mxu0 0.0
    %1638 = vmatprep.subr.mxu0 0.0
    %1639 = vmatpush1.msra.mxu0 0.0
    %1640 = vmatprep.subr.mxu0 0.0
    %1641 = vmatpush1.msra.mxu0 0.0
    %1642 = vmatprep.subr.mxu0 0.0
    %1643 = vmatpush1.msra.mxu0 0.0
    %1644 = vmatprep.subr.mxu0 0.0
    %1645 = vmatpush1.msra.mxu0 0.0
    %1646 = vmatprep.subr.mxu0 0.0
    %1647 = vmatpush1.msra.mxu0 0.0
    %1648 = vmatprep.subr.mxu0 0.0
    %1649 = vmatpush1.msra.mxu0 0.0
    %1650 = vmatprep.subr.mxu0 0.0
    %1651 = vmatpush1.msra.mxu0 0.0
    %1652 = vmatprep.subr.mxu0 0.0
    %1653 = vmatpush1.msra.mxu0 0.0
    %1654 = vmatprep.subr.mxu0 0.0
    %1655 = vmatpush1.msra.mxu0 0.0
    %1656 = vmatprep.subr.mxu0 0.0
    %1657 = vmatpush1.msra.mxu0 0.0
    %1658 = vmatprep.subr.mxu0 0.0
    %1659 = vmatpush1.msra.mxu0 0.0
    %1660 = vmatprep.subr.mxu0 0.0
    %1661 = vmatpush1.msra.mxu0 0.0
    %1662 = vmatprep.mubr.f32.mxu0 0.0
    %1663 = vmatmul.mubr.f32.gmra.mrb[0].mxu0 %v1596
    %v1664 = vpop.f32.mrb[0].mxu0
    %v1665 = vadd.f32 %v127, %v1664
    %v1666 = vpop.f32.mrb[0].mxu0
    %1667 = vdwg.mxu0
    %v1668 = vxor.u32 %v1665, 2147483648
    %v1669 = vmul.f32 %v1668, 1.442695
    %v1670 = vpow.pop %v1669
    %v1671 = vadd.f32 %v1670, 1.0
    %v1672 = vrcp.pop %v1671
    %v1673 = vmul.f32 1.0, %v1672
    %v1674 = vmul.f32 %v1673, 2.0
    %v1675 = vsub.f32 %v1674, 1.0
    %v1676 = vsel %vm115, %v1675, %v1673
    %v1677 = vmul.f32 %v1676, %v1505
    %1679 = vrot.lane.b32.xlu0 %v1676, 64
    %v1680 = vpop.permute.xlu0 %1679
    %v1682 = vmul.f32 %v1676, %v1680
    %1684 = vrot.lane.b32.xlu0 %v1682, 32
    %v1685 = vpop.permute.xlu0 %1684
    %v1687 = vadd.f32 %v1677, %v1685
    %v1688 = vtanh.pop %v1687
    %1690 = vrot.lane.b32.xlu0 %v1688, 64
    %v1691 = vpop.permute.xlu0 %1690
    %v1693 = vmul.f32 %v1676, %v1691
    %1695 = vrot.lane.b32.xlu0 %v1693, 32
    %v1696 = vpop.permute.xlu0 %1695
    %v1697 = vsel %vm121, %v1696, 0
    %1699 = vmatprep.subr.mxu0 0.0
    %1700 = vmatpush1.msra.mxu0 %v104
    %1701 = vmatprep.subr.mxu0 0.0
    %1702 = vmatpush1.msra.mxu0 %v105
    %1703 = vmatprep.subr.mxu0 0.0
    %1704 = vmatpush1.msra.mxu0 %v106
    %1705 = vmatprep.subr.mxu0 0.0
    %1706 = vmatpush1.msra.mxu0 %v107
    %1707 = vmatprep.subr.mxu0 0.0
    %1708 = vmatpush1.msra.mxu0 0.0
    %1709 = vmatprep.subr.mxu0 0.0
    %1710 = vmatpush1.msra.mxu0 0.0
    %1711 = vmatprep.subr.mxu0 0.0
    %1712 = vmatpush1.msra.mxu0 0.0
    %1713 = vmatprep.subr.mxu0 0.0
    %1714 = vmatpush1.msra.mxu0 0.0
    %1715 = vmatprep.subr.mxu0 0.0
    %1716 = vmatpush1.msra.mxu0 0.0
    %1717 = vmatprep.subr.mxu0 0.0
    %1718 = vmatpush1.msra.mxu0 0.0
    %1719 = vmatprep.subr.mxu0 0.0
    %1720 = vmatpush1.msra.mxu0 0.0
    %1721 = vmatprep.subr.mxu0 0.0
    %1722 = vmatpush1.msra.mxu0 0.0
    %1723 = vmatprep.subr.mxu0 0.0
    %1724 = vmatpush1.msra.mxu0 0.0
    %1725 = vmatprep.subr.mxu0 0.0
    %1726 = vmatpush1.msra.mxu0 0.0
    %1727 = vmatprep.subr.mxu0 0.0
    %1728 = vmatpush1.msra.mxu0 0.0
    %1729 = vmatprep.subr.mxu0 0.0
    %1730 = vmatpush1.msra.mxu0 0.0
    %1731 = vmatprep.subr.mxu0 0.0
    %1732 = vmatpush1.msra.mxu0 0.0
    %1733 = vmatprep.subr.mxu0 0.0
    %1734 = vmatpush1.msra.mxu0 0.0
    %1735 = vmatprep.subr.mxu0 0.0
    %1736 = vmatpush1.msra.mxu0 0.0
    %1737 = vmatprep.subr.mxu0 0.0
    %1738 = vmatpush1.msra.mxu0 0.0
    %1739 = vmatprep.subr.mxu0 0.0
    %1740 = vmatpush1.msra.mxu0 0.0
    %1741 = vmatprep.subr.mxu0 0.0
    %1742 = vmatpush1.msra.mxu0 0.0
    %1743 = vmatprep.subr.mxu0 0.0
    %1744 = vmatpush1.msra.mxu0 0.0
    %1745 = vmatprep.subr.mxu0 0.0
    %1746 = vmatpush1.msra.mxu0 0.0
    %1747 = vmatprep.subr.mxu0 0.0
    %1748 = vmatpush1.msra.mxu0 0.0
    %1749 = vmatprep.subr.mxu0 0.0
    %1750 = vmatpush1.msra.mxu0 0.0
    %1751 = vmatprep.subr.mxu0 0.0
    %1752 = vmatpush1.msra.mxu0 0.0
    %1753 = vmatprep.subr.mxu0 0.0
    %1754 = vmatpush1.msra.mxu0 0.0
    %1755 = vmatprep.subr.mxu0 0.0
    %1756 = vmatpush1.msra.mxu0 0.0
    %1757 = vmatprep.subr.mxu0 0.0
    %1758 = vmatpush1.msra.mxu0 0.0
    %1759 = vmatprep.subr.mxu0 0.0
    %1760 = vmatpush1.msra.mxu0 0.0
    %1761 = vmatprep.subr.mxu0 0.0
    %1762 = vmatpush1.msra.mxu0 0.0
    %1763 = vmatprep.mubr.f32.mxu0 0.0
    %1764 = vmatmul.mubr.f32.gmra.mrb[0].mxu0 %v1697
    %v1765 = vpop.f32.mrb[0].mxu0
    %v1766 = vadd.f32 %v237, %v1765
    %v1767 = vpop.f32.mrb[0].mxu0
    %1768 = vdwg.mxu0
    %s1769 = scalar_lea.vmem [#allocation11], 64
    %1770 = vst [vmem:[%s1769] sm:$0xff] %v1766
    %s1771 = scalar_lea.vmem [#allocation2], 72
    %v1772 = vld [vmem:[%s1771] sm:$0xff]
    %1773 = vrot.lane.b32.xlu0 %v1693, 64
    %v1774 = vpop.permute.xlu0 %1773
    %v1776 = vsel %vm121, %v1772, %v1774
    %v1778 = vsel %vm129, %v1776, 0
    %1780 = vmatprep.subr.mxu0 0.0
    %1781 = vmatpush1.msra.mxu0 %v95
    %1782 = vmatprep.subr.mxu0 0.0
    %1783 = vmatpush1.msra.mxu0 %v96
    %1784 = vmatprep.subr.mxu0 0.0
    %1785 = vmatpush1.msra.mxu0 %v97
    %1786 = vmatprep.subr.mxu0 0.0
    %1787 = vmatpush1.msra.mxu0 %v98
    %1788 = vmatprep.subr.mxu0 0.0
    %1789 = vmatpush1.msra.mxu0 %v99
    %1790 = vmatprep.subr.mxu0 0.0
    %1791 = vmatpush1.msra.mxu0 %v100
    %1792 = vmatprep.subr.mxu0 0.0
    %1793 = vmatpush1.msra.mxu0 %v101
    %1794 = vmatprep.subr.mxu0 0.0
    %1795 = vmatpush1.msra.mxu0 %v102
    %1796 = vmatprep.subr.mxu0 0.0
    %1797 = vmatpush1.msra.mxu0 0.0
    %1798 = vmatprep.subr.mxu0 0.0
    %1799 = vmatpush1.msra.mxu0 0.0
    %1800 = vmatprep.subr.mxu0 0.0
    %1801 = vmatpush1.msra.mxu0 0.0
    %1802 = vmatprep.subr.mxu0 0.0
    %1803 = vmatpush1.msra.mxu0 0.0
    %1804 = vmatprep.subr.mxu0 0.0
    %1805 = vmatpush1.msra.mxu0 0.0
    %1806 = vmatprep.subr.mxu0 0.0
    %1807 = vmatpush1.msra.mxu0 0.0
    %1808 = vmatprep.subr.mxu0 0.0
    %1809 = vmatpush1.msra.mxu0 0.0
    %1810 = vmatprep.subr.mxu0 0.0
    %1811 = vmatpush1.msra.mxu0 0.0
    %1812 = vmatprep.subr.mxu0 0.0
    %1813 = vmatpush1.msra.mxu0 0.0
    %1814 = vmatprep.subr.mxu0 0.0
    %1815 = vmatpush1.msra.mxu0 0.0
    %1816 = vmatprep.subr.mxu0 0.0
    %1817 = vmatpush1.msra.mxu0 0.0
    %1818 = vmatprep.subr.mxu0 0.0
    %1819 = vmatpush1.msra.mxu0 0.0
    %1820 = vmatprep.subr.mxu0 0.0
    %1821 = vmatpush1.msra.mxu0 0.0
    %1822 = vmatprep.subr.mxu0 0.0
    %1823 = vmatpush1.msra.mxu0 0.0
    %1824 = vmatprep.subr.mxu0 0.0
    %1825 = vmatpush1.msra.mxu0 0.0
    %1826 = vmatprep.subr.mxu0 0.0
    %1827 = vmatpush1.msra.mxu0 0.0
    %1828 = vmatprep.subr.mxu0 0.0
    %1829 = vmatpush1.msra.mxu0 0.0
    %1830 = vmatprep.subr.mxu0 0.0
    %1831 = vmatpush1.msra.mxu0 0.0
    %1832 = vmatprep.subr.mxu0 0.0
    %1833 = vmatpush1.msra.mxu0 0.0
    %1834 = vmatprep.subr.mxu0 0.0
    %1835 = vmatpush1.msra.mxu0 0.0
    %1836 = vmatprep.subr.mxu0 0.0
    %1837 = vmatpush1.msra.mxu0 0.0
    %1838 = vmatprep.subr.mxu0 0.0
    %1839 = vmatpush1.msra.mxu0 0.0
    %1840 = vmatprep.subr.mxu0 0.0
    %1841 = vmatpush1.msra.mxu0 0.0
    %1842 = vmatprep.subr.mxu0 0.0
    %1843 = vmatpush1.msra.mxu0 0.0
    %1844 = vmatprep.mubr.f32.mxu0 0.0
    %1845 = vmatmul.mubr.f32.gmra.mrb[0].mxu0 %v1778
    %v1846 = vpop.f32.mrb[0].mxu0
    %v1847 = vadd.f32 %v127, %v1846
    %v1848 = vpop.f32.mrb[0].mxu0
    %1849 = vdwg.mxu0
    %v1850 = vxor.u32 %v1847, 2147483648
    %v1851 = vmul.f32 %v1850, 1.442695
    %v1852 = vpow.pop %v1851
    %v1853 = vadd.f32 %v1852, 1.0
    %v1854 = vrcp.pop %v1853
    %v1855 = vmul.f32 1.0, %v1854
    %v1856 = vmul.f32 %v1855, 2.0
    %v1857 = vsub.f32 %v1856, 1.0
    %v1858 = vsel %vm115, %v1857, %v1855
    %v1859 = vmul.f32 %v1858, %v1687
    %1861 = vrot.lane.b32.xlu0 %v1858, 64
    %v1862 = vpop.permute.xlu0 %1861
    %v1864 = vmul.f32 %v1858, %v1862
    %1866 = vrot.lane.b32.xlu0 %v1864, 32
    %v1867 = vpop.permute.xlu0 %1866
    %v1869 = vadd.f32 %v1859, %v1867
    %v1870 = vtanh.pop %v1869
    %1872 = vrot.lane.b32.xlu0 %v1870, 64
    %v1873 = vpop.permute.xlu0 %1872
    %v1875 = vmul.f32 %v1858, %v1873
    %1877 = vrot.lane.b32.xlu0 %v1875, 32
    %v1878 = vpop.permute.xlu0 %1877
    %v1879 = vsel %vm121, %v1878, 0
    %1881 = vmatprep.subr.mxu0 0.0
    %1882 = vmatpush1.msra.mxu0 %v104
    %1883 = vmatprep.subr.mxu0 0.0
    %1884 = vmatpush1.msra.mxu0 %v105
    %1885 = vmatprep.subr.mxu0 0.0
    %1886 = vmatpush1.msra.mxu0 %v106
    %1887 = vmatprep.subr.mxu0 0.0
    %1888 = vmatpush1.msra.mxu0 %v107
    %1889 = vmatprep.subr.mxu0 0.0
    %1890 = vmatpush1.msra.mxu0 0.0
    %1891 = vmatprep.subr.mxu0 0.0
    %1892 = vmatpush1.msra.mxu0 0.0
    %1893 = vmatprep.subr.mxu0 0.0
    %1894 = vmatpush1.msra.mxu0 0.0
    %1895 = vmatprep.subr.mxu0 0.0
    %1896 = vmatpush1.msra.mxu0 0.0
    %1897 = vmatprep.subr.mxu0 0.0
    %1898 = vmatpush1.msra.mxu0 0.0
    %1899 = vmatprep.subr.mxu0 0.0
    %1900 = vmatpush1.msra.mxu0 0.0
    %1901 = vmatprep.subr.mxu0 0.0
    %1902 = vmatpush1.msra.mxu0 0.0
    %1903 = vmatprep.subr.mxu0 0.0
    %1904 = vmatpush1.msra.mxu0 0.0
    %1905 = vmatprep.subr.mxu0 0.0
    %1906 = vmatpush1.msra.mxu0 0.0
    %1907 = vmatprep.subr.mxu0 0.0
    %1908 = vmatpush1.msra.mxu0 0.0
    %1909 = vmatprep.subr.mxu0 0.0
    %1910 = vmatpush1.msra.mxu0 0.0
    %1911 = vmatprep.subr.mxu0 0.0
    %1912 = vmatpush1.msra.mxu0 0.0
    %1913 = vmatprep.subr.mxu0 0.0
    %1914 = vmatpush1.msra.mxu0 0.0
    %1915 = vmatprep.subr.mxu0 0.0
    %1916 = vmatpush1.msra.mxu0 0.0
    %1917 = vmatprep.subr.mxu0 0.0
    %1918 = vmatpush1.msra.mxu0 0.0
    %1919 = vmatprep.subr.mxu0 0.0
    %1920 = vmatpush1.msra.mxu0 0.0
    %1921 = vmatprep.subr.mxu0 0.0
    %1922 = vmatpush1.msra.mxu0 0.0
    %1923 = vmatprep.subr.mxu0 0.0
    %1924 = vmatpush1.msra.mxu0 0.0
    %1925 = vmatprep.subr.mxu0 0.0
    %1926 = vmatpush1.msra.mxu0 0.0
    %1927 = vmatprep.subr.mxu0 0.0
    %1928 = vmatpush1.msra.mxu0 0.0
    %1929 = vmatprep.subr.mxu0 0.0
    %1930 = vmatpush1.msra.mxu0 0.0
    %1931 = vmatprep.subr.mxu0 0.0
    %1932 = vmatpush1.msra.mxu0 0.0
    %1933 = vmatprep.subr.mxu0 0.0
    %1934 = vmatpush1.msra.mxu0 0.0
    %1935 = vmatprep.subr.mxu0 0.0
    %1936 = vmatpush1.msra.mxu0 0.0
    %1937 = vmatprep.subr.mxu0 0.0
    %1938 = vmatpush1.msra.mxu0 0.0
    %1939 = vmatprep.subr.mxu0 0.0
    %1940 = vmatpush1.msra.mxu0 0.0
    %1941 = vmatprep.subr.mxu0 0.0
    %1942 = vmatpush1.msra.mxu0 0.0
    %1943 = vmatprep.subr.mxu0 0.0
    %1944 = vmatpush1.msra.mxu0 0.0
    %1945 = vmatprep.mubr.f32.mxu0 0.0
    %1946 = vmatmul.mubr.f32.gmra.mrb[0].mxu0 %v1879
    %v1947 = vpop.f32.mrb[0].mxu0
    %v1948 = vadd.f32 %v237, %v1947
    %v1949 = vpop.f32.mrb[0].mxu0
    %1950 = vdwg.mxu0
    %s1951 = scalar_lea.vmem [#allocation11], 72
    %1952 = vst [vmem:[%s1951] sm:$0xff] %v1948
    %s1953 = scalar_lea.vmem [#allocation2], 80
    %v1954 = vld [vmem:[%s1953] sm:$0xff]
    %1955 = vrot.lane.b32.xlu0 %v1875, 64
    %v1956 = vpop.permute.xlu0 %1955
    %v1958 = vsel %vm121, %v1954, %v1956
    %v1960 = vsel %vm129, %v1958, 0
    %1962 = vmatprep.subr.mxu0 0.0
    %1963 = vmatpush1.msra.mxu0 %v95
    %1964 = vmatprep.subr.mxu0 0.0
    %1965 = vmatpush1.msra.mxu0 %v96
    %1966 = vmatprep.subr.mxu0 0.0
    %1967 = vmatpush1.msra.mxu0 %v97
    %1968 = vmatprep.subr.mxu0 0.0
    %1969 = vmatpush1.msra.mxu0 %v98
    %1970 = vmatprep.subr.mxu0 0.0
    %1971 = vmatpush1.msra.mxu0 %v99
    %1972 = vmatprep.subr.mxu0 0.0
    %1973 = vmatpush1.msra.mxu0 %v100
    %1974 = vmatprep.subr.mxu0 0.0
    %1975 = vmatpush1.msra.mxu0 %v101
    %1976 = vmatprep.subr.mxu0 0.0
    %1977 = vmatpush1.msra.mxu0 %v102
    %1978 = vmatprep.subr.mxu0 0.0
    %1979 = vmatpush1.msra.mxu0 0.0
    %1980 = vmatprep.subr.mxu0 0.0
    %1981 = vmatpush1.msra.mxu0 0.0
    %1982 = vmatprep.subr.mxu0 0.0
    %1983 = vmatpush1.msra.mxu0 0.0
    %1984 = vmatprep.subr.mxu0 0.0
    %1985 = vmatpush1.msra.mxu0 0.0
    %1986 = vmatprep.subr.mxu0 0.0
    %1987 = vmatpush1.msra.mxu0 0.0
    %1988 = vmatprep.subr.mxu0 0.0
    %1989 = vmatpush1.msra.mxu0 0.0
    %1990 = vmatprep.subr.mxu0 0.0
    %1991 = vmatpush1.msra.mxu0 0.0
    %1992 = vmatprep.subr.mxu0 0.0
    %1993 = vmatpush1.msra.mxu0 0.0
    %1994 = vmatprep.subr.mxu0 0.0
    %1995 = vmatpush1.msra.mxu0 0.0
    %1996 = vmatprep.subr.mxu0 0.0
    %1997 = vmatpush1.msra.mxu0 0.0
    %1998 = vmatprep.subr.mxu0 0.0
    %1999 = vmatpush1.msra.mxu0 0.0
    %2000 = vmatprep.subr.mxu0 0.0
    %2001 = vmatpush1.msra.mxu0 0.0
    %2002 = vmatprep.subr.mxu0 0.0
    %2003 = vmatpush1.msra.mxu0 0.0
    %2004 = vmatprep.subr.mxu0 0.0
    %2005 = vmatpush1.msra.mxu0 0.0
    %2006 = vmatprep.subr.mxu0 0.0
    %2007 = vmatpush1.msra.mxu0 0.0
    %2008 = vmatprep.subr.mxu0 0.0
    %2009 = vmatpush1.msra.mxu0 0.0
    %2010 = vmatprep.subr.mxu0 0.0
    %2011 = vmatpush1.msra.mxu0 0.0
    %2012 = vmatprep.subr.mxu0 0.0
    %2013 = vmatpush1.msra.mxu0 0.0
    %2014 = vmatprep.subr.mxu0 0.0
    %2015 = vmatpush1.msra.mxu0 0.0
    %2016 = vmatprep.subr.mxu0 0.0
    %2017 = vmatpush1.msra.mxu0 0.0
    %2018 = vmatprep.subr.mxu0 0.0
    %2019 = vmatpush1.msra.mxu0 0.0
    %2020 = vmatprep.subr.mxu0 0.0
    %2021 = vmatpush1.msra.mxu0 0.0
    %2022 = vmatprep.subr.mxu0 0.0
    %2023 = vmatpush1.msra.mxu0 0.0
    %2024 = vmatprep.subr.mxu0 0.0
    %2025 = vmatpush1.msra.mxu0 0.0
    %2026 = vmatprep.mubr.f32.mxu0 0.0
    %2027 = vmatmul.mubr.f32.gmra.mrb[0].mxu0 %v1960
    %v2028 = vpop.f32.mrb[0].mxu0
    %v2029 = vadd.f32 %v127, %v2028
    %v2030 = vpop.f32.mrb[0].mxu0
    %2031 = vdwg.mxu0
    %v2032 = vxor.u32 %v2029, 2147483648
    %v2033 = vmul.f32 %v2032, 1.442695
    %v2034 = vpow.pop %v2033
    %v2035 = vadd.f32 %v2034, 1.0
    %v2036 = vrcp.pop %v2035
    %v2037 = vmul.f32 1.0, %v2036
    %v2038 = vmul.f32 %v2037, 2.0
    %v2039 = vsub.f32 %v2038, 1.0
    %v2040 = vsel %vm115, %v2039, %v2037
    %v2041 = vmul.f32 %v2040, %v1869
    %2043 = vrot.lane.b32.xlu0 %v2040, 64
    %v2044 = vpop.permute.xlu0 %2043
    %v2046 = vmul.f32 %v2040, %v2044
    %2048 = vrot.lane.b32.xlu0 %v2046, 32
    %v2049 = vpop.permute.xlu0 %2048
    %v2051 = vadd.f32 %v2041, %v2049
    %v2052 = vtanh.pop %v2051
    %2054 = vrot.lane.b32.xlu0 %v2052, 64
    %v2055 = vpop.permute.xlu0 %2054
    %v2057 = vmul.f32 %v2040, %v2055
    %2059 = vrot.lane.b32.xlu0 %v2057, 32
    %v2060 = vpop.permute.xlu0 %2059
    %v2061 = vsel %vm121, %v2060, 0
    %2063 = vmatprep.subr.mxu0 0.0
    %2064 = vmatpush1.msra.mxu0 %v104
    %2065 = vmatprep.subr.mxu0 0.0
    %2066 = vmatpush1.msra.mxu0 %v105
    %2067 = vmatprep.subr.mxu0 0.0
    %2068 = vmatpush1.msra.mxu0 %v106
    %2069 = vmatprep.subr.mxu0 0.0
    %2070 = vmatpush1.msra.mxu0 %v107
    %2071 = vmatprep.subr.mxu0 0.0
    %2072 = vmatpush1.msra.mxu0 0.0
    %2073 = vmatprep.subr.mxu0 0.0
    %2074 = vmatpush1.msra.mxu0 0.0
    %2075 = vmatprep.subr.mxu0 0.0
    %2076 = vmatpush1.msra.mxu0 0.0
    %2077 = vmatprep.subr.mxu0 0.0
    %2078 = vmatpush1.msra.mxu0 0.0
    %2079 = vmatprep.subr.mxu0 0.0
    %2080 = vmatpush1.msra.mxu0 0.0
    %2081 = vmatprep.subr.mxu0 0.0
    %2082 = vmatpush1.msra.mxu0 0.0
    %2083 = vmatprep.subr.mxu0 0.0
    %2084 = vmatpush1.msra.mxu0 0.0
    %2085 = vmatprep.subr.mxu0 0.0
    %2086 = vmatpush1.msra.mxu0 0.0
    %2087 = vmatprep.subr.mxu0 0.0
    %2088 = vmatpush1.msra.mxu0 0.0
    %2089 = vmatprep.subr.mxu0 0.0
    %2090 = vmatpush1.msra.mxu0 0.0
    %2091 = vmatprep.subr.mxu0 0.0
    %2092 = vmatpush1.msra.mxu0 0.0
    %2093 = vmatprep.subr.mxu0 0.0
    %2094 = vmatpush1.msra.mxu0 0.0
    %2095 = vmatprep.subr.mxu0 0.0
    %2096 = vmatpush1.msra.mxu0 0.0
    %2097 = vmatprep.subr.mxu0 0.0
    %2098 = vmatpush1.msra.mxu0 0.0
    %2099 = vmatprep.subr.mxu0 0.0
    %2100 = vmatpush1.msra.mxu0 0.0
    %2101 = vmatprep.subr.mxu0 0.0
    %2102 = vmatpush1.msra.mxu0 0.0
    %2103 = vmatprep.subr.mxu0 0.0
    %2104 = vmatpush1.msra.mxu0 0.0
    %2105 = vmatprep.subr.mxu0 0.0
    %2106 = vmatpush1.msra.mxu0 0.0
    %2107 = vmatprep.subr.mxu0 0.0
    %2108 = vmatpush1.msra.mxu0 0.0
    %2109 = vmatprep.subr.mxu0 0.0
    %2110 = vmatpush1.msra.mxu0 0.0
    %2111 = vmatprep.subr.mxu0 0.0
    %2112 = vmatpush1.msra.mxu0 0.0
    %2113 = vmatprep.subr.mxu0 0.0
    %2114 = vmatpush1.msra.mxu0 0.0
    %2115 = vmatprep.subr.mxu0 0.0
    %2116 = vmatpush1.msra.mxu0 0.0
    %2117 = vmatprep.subr.mxu0 0.0
    %2118 = vmatpush1.msra.mxu0 0.0
    %2119 = vmatprep.subr.mxu0 0.0
    %2120 = vmatpush1.msra.mxu0 0.0
    %2121 = vmatprep.subr.mxu0 0.0
    %2122 = vmatpush1.msra.mxu0 0.0
    %2123 = vmatprep.subr.mxu0 0.0
    %2124 = vmatpush1.msra.mxu0 0.0
    %2125 = vmatprep.subr.mxu0 0.0
    %2126 = vmatpush1.msra.mxu0 0.0
    %2127 = vmatprep.mubr.f32.mxu0 0.0
    %2128 = vmatmul.mubr.f32.gmra.mrb[0].mxu0 %v2061
    %v2129 = vpop.f32.mrb[0].mxu0
    %v2130 = vadd.f32 %v237, %v2129
    %v2131 = vpop.f32.mrb[0].mxu0
    %2132 = vdwg.mxu0
    %s2133 = scalar_lea.vmem [#allocation11], 80
    %2134 = vst [vmem:[%s2133] sm:$0xff] %v2130
    %2136 = vst.msk [vmem:[#allocation12] sm:$0xff] %vm121, %v2060
    %2138 = vrot.lane.b32.xlu0 %v2051, 96
    %v2139 = vpop.permute.xlu0 %2138
    %2141 = vst.msk [vmem:[#allocation14] sm:$0xff] %vm121, %v2139
    // Predicated region
    $region50: #{tpu_custom_call.1} parent=1 // pred_check
      _
    $region51: #{tpu_custom_call.1} parent=1 // pred_check_branch
      %2143 = sbr.rel (0) target = $region53
    $region52: #{tpu_custom_call.1} parent=1 // pred_region
      %s2145 = ssub.s32 1408, 1408
      %2146 = vsyncadd [#allocation4], %s2145
      %s2147 = sshll.u32 [#allocation11], 4
      %s2148 = int_to_ptr.vmem [resolvable:$true] %s2147
      %2153 = dma.vmem_to_hbm [thread:$0]  %s2148, 1408, %s7, [#allocation4], 128, 128, 8
    $region53: #{tpu_custom_call.1} parent=1 // pred_fallthru
      _
    // Predicated region
    $region54: #{tpu_custom_call.1} parent=1 // pred_check
      _
    $region55: #{tpu_custom_call.1} parent=1 // pred_check_branch
      %2155 = sbr.rel (0) target = $region57
    $region56: #{tpu_custom_call.1} parent=1 // pred_region
      %s2157 = ssub.s32 128, 128
      %2158 = vsyncadd [#allocation13], %s2157
      %s2160 = sshll.u32 [#allocation12], 4
      %s2161 = int_to_ptr.vmem [resolvable:$true] %s2160
      %2163 = dma.vmem_to_hbm [thread:$0]  %s2161, 128, %s8, [#allocation13]
    $region57: #{tpu_custom_call.1} parent=1 // pred_fallthru
      _
    // Predicated region
    $region58: #{tpu_custom_call.1} parent=1 // pred_check
      _
    $region59: #{tpu_custom_call.1} parent=1 // pred_check_branch
      %2165 = sbr.rel (0) target = $region61
    $region60: #{tpu_custom_call.1} parent=1 // pred_region
      %s2167 = ssub.s32 128, 128
      %2168 = vsyncadd [#allocation13], %s2167
      %s2170 = sshll.u32 [#allocation14], 4
      %s2171 = int_to_ptr.vmem [resolvable:$true] %s2170
      %2173 = dma.vmem_to_hbm [thread:$0]  %s2171, 128, %s9, [#allocation13]
    $region61: #{tpu_custom_call.1} parent=1 // pred_fallthru
      _
    // Predicated region
    $region62: #{tpu_custom_call.1} parent=1 // pred_check
      _
    $region63: #{tpu_custom_call.1} parent=1 // pred_check_branch
      %2175 = sbr.rel (0) target = $region65
    $region64: #{tpu_custom_call.1} parent=1 // pred_region
      %2176 = dma.done [#allocation4], 1408
    $region65: #{tpu_custom_call.1} parent=1 // pred_fallthru
      _
    // Predicated region
    $region66: #{tpu_custom_call.1} parent=1 // pred_check
      _
    $region67: #{tpu_custom_call.1} parent=1 // pred_check_branch
      %2178 = sbr.rel (0) target = $region69
    $region68: #{tpu_custom_call.1} parent=1 // pred_region
      %2179 = dma.done [#allocation13], 128
    $region69: #{tpu_custom_call.1} parent=1 // pred_fallthru
      _
    // Predicated region
    $region70: #{tpu_custom_call.1} parent=1 // pred_check
      _
    $region71: #{tpu_custom_call.1} parent=1 // pred_check_branch
      %2181 = sbr.rel (0) target = $region73
    $region72: #{tpu_custom_call.1} parent=1 // pred_region
      %2182 = dma.done [#allocation13], 128
    $region73: #{tpu_custom_call.1} parent=1 // pred_fallthru
      _
    %2183 = vsyncpa [#allocation3], 1
    %2184 = vsyncpa [#allocation6], 1
    %2185 = vsyncpa [#allocation9], 1
    %2186 = vsyncpa [#allocation4], 1
    %2187 = vsyncpa [#allocation13], 1

</llo_original>
